<compile_context>
chip_gen: v5e
topology: v5e:2x2
jax: 0.10.0
libtpu: 0.0.40
codegen_flags: <defaults>
</compile_context>

<pallas_src>
import math
import re

import jax
import jax.numpy as jnp
import numpy as np
from jax.experimental import pallas as pl
from jax.experimental.pallas import tpu as pltpu

BN_EPS = 1e-5
FILTERS = (3, 4, 5)


def _round_up(x, m):
    return ((x + m - 1) // m) * m


def _tpu_generation():
    """Best-effort TPU generation from device_kind (e.g. 'TPU v6e' -> 6)."""
    try:
        kind = jax.devices()[0].device_kind
    except Exception:
        return 6
    m = re.search(r"(\d+)", kind)
    return int(m.group(1)) if m else 6


def _pick_batch_tile(batch, L, KW, C3, NP, budget_bytes, max_tile=512):
    """Largest multiple-of-8 batch tile whose VMEM working set fits the budget.

    Per batch row: double-buffered bf16 emb_cat block with its lane padding
    (KW=160 -> 256 lanes), ~two live f32 [L, C3->256] epilogue slabs, and the
    double-buffered f32 output row; plus the resident weights (fixed cost).
    """
    lane = 128
    kw_pad = _round_up(KW, lane)
    c3_pad = _round_up(C3, lane)
    np_pad = _round_up(NP, lane)
    per_row = (2 * L * kw_pad * 2        # bf16 emb_cat block, double-buffered
               + 2 * L * c3_pad * 4      # f32 conv / epilogue slabs
               + 2 * np_pad * 4)         # f32 output block, double-buffered
    fixed = 2 * (kw_pad * c3_pad * 2     # W_big (resident, conservatively padded)
                 + c3_pad * np_pad * 2   # projection weight
                 + (2 + L) * c3_pad * 4  # conv bias, BN scale, shift_mask
                 + np_pad * 4)           # projection bias
    avail = max(budget_bytes - fixed, per_row * 8)
    tb = max(8, (avail // per_row) // 8 * 8)
    return int(min(tb, _round_up(batch, 8), max_tile))


def cnn_kernel(embcat_ref, wbig_ref, bias_ref, scale_ref, shiftmask_ref,
               pw_ref, pb_ref, out_ref):
    TB, L, KW = embcat_ref.shape
    C3 = wbig_ref.shape[1]

    # [TB*L, KW] bf16 -- merging leading dims is layout-trivial (minor dim kept).
    x = embcat_ref[...].reshape(TB * L, KW)

    # Single fused MXU matmul covering every filter width and tap.  Rows of
    # W_big belonging to taps >= a branch's filter width are zero, so the
    # zero-padded taps of narrower filters contribute nothing.
    conv = jnp.dot(x, wbig_ref[...],
                   preferred_element_type=jnp.float32).reshape(TB, L, C3)

    # conv bias + ReLU + BatchNorm2d(eval) + (-inf) time mask + max-pool over L.
    # shift_mask = BN shift + mask (folded in the wrapper); the mask is added
    # AFTER the scale multiply so -inf propagates without NaNs.
    # Note: if a bundle dump ever shows the vld/vst slots saturating (spills) at
    # very large batch tiles, chunk this epilogue over TB with
    # lax.fori_loop(..., unroll=True); at the tiles picked by _pick_batch_tile
    # the slab streams through VMEM without spilling.
    h = jnp.maximum(conv + bias_ref[...][None], 0.0)
    h = h * scale_ref[...][None] + shiftmask_ref[...][None]
    feat = jnp.max(h, axis=1)                                   # [TB, C3] f32

    # TODO(synk): Dropout(p=0.5) is stochastic (training mode); identity here.

    # Projection matmul; ntags padded to 128 so the output store is lane-dense.
    logits = jnp.dot(feat.astype(pw_ref.dtype), pw_ref[...],
                     preferred_element_type=jnp.float32) + pb_ref[...]
    out_ref[...] = logits


def cnn_forward(words, params, *, batch_tile=None):
    # Glue: embedding lookup (gather) + lane-dense im2col stay in plain JAX.
    emb = params['embedding'][words].astype(jnp.bfloat16)       # [B, L, E]
    B, L, E = emb.shape
    C = params['b3'].shape[-1]
    nf = len(FILTERS)
    C3 = nf * C
    FMAX = max(FILTERS)
    KW = FMAX * E
    ntags = params['proj_b'].shape[-1]
    NP = _round_up(max(ntags, 128), 128)                        # lane-dense out

    if L < FMAX:
        raise ValueError(
            f"sequence length {L} must be >= max filter width {FMAX}")

    # ---- wrapper-side im2col: taps[i][b,t] = emb[b, t+i] (0 past sequence end).
    # Invalid time positions are either zero-weighted in W_big or masked -inf.
    taps = [emb] + [jnp.pad(emb[:, i:, :], ((0, 0), (0, i), (0, 0)))
                    for i in range(1, FMAX)]
    emb_cat = jnp.concatenate(taps, axis=-1)                    # [B, L, KW] bf16

    # ---- pack conv weights: W_big[i*E + e, k*C + c] = w_fk[i, e, c] -----------
    cols = []
    for f in FILTERS:
        w = params[f'w{f}']                                              # [f,E,C]
        w = jnp.concatenate([w, jnp.zeros((FMAX - f, E, C), w.dtype)], axis=0)
        cols.append(w.reshape(KW, C))
    wbig = jnp.concatenate(cols, axis=1).astype(jnp.bfloat16)            # [KW,3C]

    bcat = jnp.concatenate([params[f'b{f}'] for f in FILTERS], axis=-1)  # [1,3C]

    # BatchNorm2d (eval) folded to per-channel scale/shift, shared by branches.
    scale = params['bn_gamma'] * jax.lax.rsqrt(params['bn_var'] + BN_EPS)
    shift = params['bn_beta'] - params['bn_mean'] * scale
    scale3 = jnp.tile(scale, (1, nf))                                    # [1,3C]
    shift3 = jnp.tile(shift, (1, nf))

    # -inf additive mask past each filter's valid length, folded with BN shift.
    t = np.arange(L)[:, None]
    fw = np.repeat(np.asarray(FILTERS, np.int32), C)[None, :]
    mask = np.where(t < (L - fw + 1), 0.0, -np.inf).astype(np.float32)   # [L,3C]
    shift_mask = shift3 + jnp.asarray(mask)                              # [L,3C]

    # Projection padded to a lane-dense 128-wide output.
    pw = jnp.zeros((C3, NP), jnp.bfloat16).at[:, :ntags].set(
        params['proj_w'].astype(jnp.bfloat16))
    pb = jnp.zeros((1, NP), jnp.float32).at[:, :ntags].set(params['proj_b'])

    # ---- per-generation tile / VMEM sizing -------------------------------------
    gen = _tpu_generation()
    if gen >= 7:          # v7x: 64 MiB VMEM per TC, 2 TensorCores
        vmem_limit, budget = 48 * 1024 * 1024, 20 * 1024 * 1024
    elif gen >= 5:        # v5e / v6e: 128 MiB VMEM, 1 TensorCore
        vmem_limit, budget = 96 * 1024 * 1024, 40 * 1024 * 1024
    else:                 # older parts: conservative defaults
        vmem_limit, budget = 32 * 1024 * 1024, 8 * 1024 * 1024

    if batch_tile is None:
        tb = _pick_batch_tile(B, L, KW, C3, NP, budget)
        if gen >= 7:
            # Keep >= 2 grid steps so ("parallel",) shards across both v7x TCs.
            tb = min(tb, max(8, _round_up(pl.cdiv(B, 2), 8)))
    else:
        tb = batch_tile
    nb = pl.cdiv(B, tb)
    B_pad = nb * tb
    if B_pad != B:
        emb_cat = jnp.pad(emb_cat, ((0, B_pad - B), (0, 0), (0, 0)))

    flops = 2 * B_pad * L * KW * C3 + 2 * B_pad * C3 * NP
    bytes_accessed = (emb_cat.size * 2 + wbig.size * 2 + pw.size * 2
                      + (bcat.size + scale3.size + shift_mask.size
                         + pb.size + B_pad * NP) * 4)

    grid_spec = pltpu.PrefetchScalarGridSpec(
        num_scalar_prefetch=0,
        grid=(nb,),
        in_specs=[
            pl.BlockSpec((tb, L, KW), lambda i: (i, 0, 0)),  # emb_cat (pipelined)
            pl.BlockSpec((KW, C3), lambda i: (0, 0)),        # W_big (resident)
            pl.BlockSpec((1, C3), lambda i: (0, 0)),         # conv bias
            pl.BlockSpec((1, C3), lambda i: (0, 0)),         # BN scale
            pl.BlockSpec((L, C3), lambda i: (0, 0)),         # BN shift + -inf mask
            pl.BlockSpec((C3, NP), lambda i: (0, 0)),        # proj weight
            pl.BlockSpec((1, NP), lambda i: (0, 0)),         # proj bias
        ],
        out_specs=pl.BlockSpec((tb, NP), lambda i: (i, 0)),
    )

    out = pl.pallas_call(
        cnn_kernel,
        out_shape=jax.ShapeDtypeStruct((B_pad, NP), jnp.float32),
        grid_spec=grid_spec,
        compiler_params=pltpu.CompilerParams(
            dimension_semantics=("parallel",),      # batch tiles independent
            vmem_limit_bytes=vmem_limit,
        ),
        cost_estimate=pl.CostEstimate(
            flops=int(flops), transcendentals=0,
            bytes_accessed=int(bytes_accessed)),
    )(emb_cat, wbig, bcat, scale3, shift_mask, pw, pb)

    return out[:B, :ntags]


def reference_forward(words, p):
    """Pure-JAX reference (lax.conv, NCHW like PyTorch).  Conv / projection
    operands are rounded to bf16 exactly like the kernel so the comparison is
    tight."""
    emb = p['embedding'][words]
    embq = emb.astype(jnp.bfloat16).astype(jnp.float32)       # [B, L, E]
    x = embq[:, None, :, :]                                   # [B, 1, L, E]
    scale = p['bn_gamma'].reshape(-1) * jax.lax.rsqrt(p['bn_var'].reshape(-1)
                                                      + BN_EPS)
    shift = p['bn_beta'].reshape(-1) - p['bn_mean'].reshape(-1) * scale
    feats = []
    for f in FILTERS:
        w = p[f'w{f}'].astype(jnp.bfloat16).astype(jnp.float32)   # [f, E, C]
        w_oihw = jnp.transpose(w, (2, 0, 1))[:, None, :, :]       # [C, 1, f, E]
        conv = jax.lax.conv_general_dilated(x, w_oihw, (1, 1), 'VALID')
        conv = conv + p[f'b{f}'].reshape(1, -1, 1, 1)             # [B, C, T, 1]
        h = jnp.maximum(conv, 0.0)
        h = h * scale.reshape(1, -1, 1, 1) + shift.reshape(1, -1, 1, 1)
        feats.append(jnp.max(h[..., 0], axis=2))                  # [B, C]
    hcat = jnp.concatenate(feats, axis=1)                         # [B, 3C]
    hq = hcat.astype(jnp.bfloat16)
    pwq = p['proj_w'].astype(jnp.bfloat16)
    return jnp.dot(hq, pwq, preferred_element_type=jnp.float32) + p['proj_b']


def init_params(key, nwords, emb_size, num_filters, ntags):
    ks = jax.random.split(key, 8)
    params = {}
    params['embedding'] = 0.1 * jax.random.normal(ks[0], (nwords, emb_size),
                                                  jnp.float32)
    for i, f in enumerate(FILTERS):
        fan_in = 1 * f * emb_size
        bound = 1.0 / math.sqrt(fan_in)
        params[f'w{f}'] = jax.random.uniform(ks[1 + i], (f, emb_size, num_filters),
                                             jnp.float32, -bound, bound)
        params[f'b{f}'] = jax.random.uniform(ks[4 + i], (1, num_filters),
                                             jnp.float32, -bound, bound)
    # BatchNorm2d(50) fresh init (running stats, eval mode).
    params['bn_gamma'] = jnp.ones((1, num_filters), jnp.float32)
    params['bn_beta'] = jnp.zeros((1, num_filters), jnp.float32)
    params['bn_mean'] = jnp.zeros((1, num_filters), jnp.float32)
    params['bn_var'] = jnp.ones((1, num_filters), jnp.float32)
    # Linear(3*50 -> ntags), xavier_uniform_ weight, zero bias.
    fan_in = len(FILTERS) * num_filters
    limit = math.sqrt(6.0 / (fan_in + ntags))
    params['proj_w'] = jax.random.uniform(ks[7], (fan_in, ntags),
                                          jnp.float32, -limit, limit)
    params['proj_b'] = jnp.zeros((1, ntags), jnp.float32)
    return params


if __name__ == "__main__":
    nwords, emb_size, num_filters, ntags = 100, 32, 50, 5
    B, L = 32, 16

    key = jax.random.PRNGKey(0)
    pkey, wkey = jax.random.split(key)
    params = init_params(pkey, nwords, emb_size, num_filters, ntags)
    words = jax.random.randint(wkey, (B, L), 0, nwords, dtype=jnp.int32)

    # Auto-picked tile: single grid step on v5e/v6e, >=2 steps on v7x.
    out = jax.block_until_ready(cnn_forward(words, params))
    ref = jax.block_until_ready(reference_forward(words, params))
    np.testing.assert_allclose(np.asarray(out), np.asarray(ref),
                               rtol=2e-3, atol=2e-3)
    assert out.shape == (B, ntags)

    # Also exercise the multi-step pipelined grid and the batch-padding path.
    out2 = jax.block_until_ready(cnn_forward(words[:27], params, batch_tile=8))
    ref2 = jax.block_until_ready(reference_forward(words[:27], params))
    np.testing.assert_allclose(np.asarray(out2), np.asarray(ref2),
                               rtol=2e-3, atol=2e-3)

    print("KERNEL_OK")
</pallas_src>

<mosaic_0001>
module attributes {stable_mosaic.version = 11 : i64} {
  func.func @cnn_kernel(%arg0: i32, %arg1: memref<32x16x160xbf16, #tpu.memory_space<vmem>>, %arg2: memref<160x150xbf16, #tpu.memory_space<vmem>>, %arg3: memref<1x150xf32, #tpu.memory_space<vmem>>, %arg4: memref<1x150xf32, #tpu.memory_space<vmem>>, %arg5: memref<16x150xf32, #tpu.memory_space<vmem>>, %arg6: memref<150x128xbf16, #tpu.memory_space<vmem>>, %arg7: memref<1x128xf32, #tpu.memory_space<vmem>>, %arg8: memref<32x128xf32, #tpu.memory_space<vmem>>) attributes {dimension_semantics = [#tpu.dimension_semantics<parallel>], iteration_bounds = array<i64: 1>, scalar_prefetch = 0 : i64, scratch_operands = 0 : i64, tpu.core_type = #tpu.core_type<tc>, window_params = [{transform_indices = @transform_0, window_bounds = array<i64: 32, 16, 160>}, {pipeline_mode = #tpu.pipeline_mode<synchronous>, transform_indices = @transform_1, window_bounds = array<i64: 160, 150>}, {pipeline_mode = #tpu.pipeline_mode<synchronous>, transform_indices = @transform_2, window_bounds = array<i64: 1, 150>}, {pipeline_mode = #tpu.pipeline_mode<synchronous>, transform_indices = @transform_3, window_bounds = array<i64: 1, 150>}, {pipeline_mode = #tpu.pipeline_mode<synchronous>, transform_indices = @transform_4, window_bounds = array<i64: 16, 150>}, {pipeline_mode = #tpu.pipeline_mode<synchronous>, transform_indices = @transform_5, window_bounds = array<i64: 150, 128>}, {pipeline_mode = #tpu.pipeline_mode<synchronous>, transform_indices = @transform_6, window_bounds = array<i64: 1, 128>}, {transform_indices = @transform_7, window_bounds = array<i64: 32, 128>}]} {
    %c0 = arith.constant 0 : index
    %c0_0 = arith.constant 0 : index
    %c0_1 = arith.constant 0 : index
    %0 = vector.load %arg1[%c0, %c0_0, %c0_1] : memref<32x16x160xbf16, #tpu.memory_space<vmem>>, vector<32x16x160xbf16>
    %1 = vector.shape_cast %0 : vector<32x16x160xbf16> to vector<512x160xbf16>
    %c0_2 = arith.constant 0 : index
    %c0_3 = arith.constant 0 : index
    %2 = vector.load %arg2[%c0_2, %c0_3] : memref<160x150xbf16, #tpu.memory_space<vmem>>, vector<160x150xbf16>
    %cst = arith.constant dense<0.000000e+00> : vector<512x150xf32>
    %3 = tpu.matmul %1, %2, %cst {dimension_numbers = #tpu.dot_dimension_numbers<[1], [0], [0], [1], [0, 0, 1, 1], [], []>} : vector<512x160xbf16>, vector<160x150xbf16>, vector<512x150xf32> -> vector<512x150xf32>
    %4 = vector.shape_cast %3 : vector<512x150xf32> to vector<32x16x150xf32>
    %c0_4 = arith.constant 0 : index
    %c0_5 = arith.constant 0 : index
    %5 = vector.load %arg3[%c0_4, %c0_5] : memref<1x150xf32, #tpu.memory_space<vmem>>, vector<1x150xf32>
    %6 = vector.shape_cast %5 : vector<1x150xf32> to vector<1x1x150xf32>
    %7 = vector.broadcast %6 : vector<1x1x150xf32> to vector<32x16x150xf32>
    %8 = arith.addf %4, %7 : vector<32x16x150xf32>
    %cst_6 = arith.constant 0.000000e+00 : f32
    %9 = vector.broadcast %cst_6 : f32 to vector<32x16x150xf32>
    %10 = arith.maximumf %8, %9 : vector<32x16x150xf32>
    %c0_7 = arith.constant 0 : index
    %c0_8 = arith.constant 0 : index
    %11 = vector.load %arg4[%c0_7, %c0_8] : memref<1x150xf32, #tpu.memory_space<vmem>>, vector<1x150xf32>
    %12 = vector.shape_cast %11 : vector<1x150xf32> to vector<1x1x150xf32>
    %13 = vector.broadcast %12 : vector<1x1x150xf32> to vector<32x16x150xf32>
    %14 = arith.mulf %10, %13 : vector<32x16x150xf32>
    %c0_9 = arith.constant 0 : index
    %c0_10 = arith.constant 0 : index
    %15 = vector.load %arg5[%c0_9, %c0_10] : memref<16x150xf32, #tpu.memory_space<vmem>>, vector<16x150xf32>
    %16 = vector.shape_cast %15 : vector<16x150xf32> to vector<1x16x150xf32>
    %17 = vector.broadcast %16 : vector<1x16x150xf32> to vector<32x16x150xf32>
    %18 = arith.addf %14, %17 : vector<32x16x150xf32>
    %cst_11 = arith.constant dense<0xFF800000> : vector<32x150xf32>
    %19 = vector.multi_reduction <maximumf>, %18, %cst_11 [1] : vector<32x16x150xf32> to vector<32x150xf32>
    %20 = arith.truncf %19 : vector<32x150xf32> to vector<32x150xbf16>
    %c0_12 = arith.constant 0 : index
    %c0_13 = arith.constant 0 : index
    %21 = vector.load %arg6[%c0_12, %c0_13] : memref<150x128xbf16, #tpu.memory_space<vmem>>, vector<150x128xbf16>
    %cst_14 = arith.constant dense<0.000000e+00> : vector<32x128xf32>
    %22 = tpu.matmul %20, %21, %cst_14 {dimension_numbers = #tpu.dot_dimension_numbers<[1], [0], [0], [1], [0, 0, 1, 1], [], []>} : vector<32x150xbf16>, vector<150x128xbf16>, vector<32x128xf32> -> vector<32x128xf32>
    %c0_15 = arith.constant 0 : index
    %c0_16 = arith.constant 0 : index
    %23 = vector.load %arg7[%c0_15, %c0_16] : memref<1x128xf32, #tpu.memory_space<vmem>>, vector<1x128xf32>
    %24 = vector.broadcast %23 : vector<1x128xf32> to vector<32x128xf32>
    %25 = arith.addf %22, %24 : vector<32x128xf32>
    %c0_17 = arith.constant 0 : index
    %c0_18 = arith.constant 0 : index
    %26 = vector.load %arg8[%c0_17, %c0_18] : memref<32x128xf32, #tpu.memory_space<vmem>>, vector<32x128xf32>
    tpu.vector_store %arg8[%c0_17, %c0_18], %25 {strides = array<i32>} : memref<32x128xf32, #tpu.memory_space<vmem>>, vector<32x128xf32>,
    return
  }
  func.func @transform_0(%arg0: i32) -> (i32, i32, i32) {
    %c0_i32 = arith.constant 0 : i32
    %c0_i32_0 = arith.constant 0 : i32
    %c0_i32_1 = arith.constant 0 : i32
    return %arg0, %c0_i32, %c0_i32_0 : i32, i32, i32
  }
  func.func @transform_1(%arg0: i32) -> (i32, i32) {
    %c0_i32 = arith.constant 0 : i32
    %c0_i32_0 = arith.constant 0 : i32
    %c0_i32_1 = arith.constant 0 : i32
    return %c0_i32, %c0_i32_0 : i32, i32
  }
  func.func @transform_2(%arg0: i32) -> (i32, i32) {
    %c0_i32 = arith.constant 0 : i32
    %c0_i32_0 = arith.constant 0 : i32
    %c0_i32_1 = arith.constant 0 : i32
    return %c0_i32, %c0_i32_0 : i32, i32
  }
  func.func @transform_3(%arg0: i32) -> (i32, i32) {
    %c0_i32 = arith.constant 0 : i32
    %c0_i32_0 = arith.constant 0 : i32
    %c0_i32_1 = arith.constant 0 : i32
    return %c0_i32, %c0_i32_0 : i32, i32
  }
  func.func @transform_4(%arg0: i32) -> (i32, i32) {
    %c0_i32 = arith.constant 0 : i32
    %c0_i32_0 = arith.constant 0 : i32
    %c0_i32_1 = arith.constant 0 : i32
    return %c0_i32, %c0_i32_0 : i32, i32
  }
  func.func @transform_5(%arg0: i32) -> (i32, i32) {
    %c0_i32 = arith.constant 0 : i32
    %c0_i32_0 = arith.constant 0 : i32
    %c0_i32_1 = arith.constant 0 : i32
    return %c0_i32, %c0_i32_0 : i32, i32
  }
  func.func @transform_6(%arg0: i32) -> (i32, i32) {
    %c0_i32 = arith.constant 0 : i32
    %c0_i32_0 = arith.constant 0 : i32
    %c0_i32_1 = arith.constant 0 : i32
    return %c0_i32, %c0_i32_0 : i32, i32
  }
  func.func @transform_7(%arg0: i32) -> (i32, i32) {
    %c0_i32 = arith.constant 0 : i32
    %c0_i32_0 = arith.constant 0 : i32
    return %arg0, %c0_i32 : i32, i32
  }
}

</mosaic_0001>

<llo_original>
// kernel: tpu_custom_call.1
$region0: #{tpu_custom_call.1}
  #allocation0 [shape = 'u32[]', space=smem, size = 0x4, offset = 0x4, fixed_abs, tag = 'smem constant byte address 0x4 - core index']
  #allocation1 [shape = 'u32[72,128]{1,0:T(1,128)}', space=vmem, size = 0x9000, scoped, tag = 'internal scratch']
  %s0 = inlined_call_operand.hbm [shape: bf16[32,16,160], index: 0, kind: input, shape index: {}]
  %s1 = inlined_call_operand.vmem [shape: bf16[160,150], index: 1, kind: input, shape index: {}]
  %s2 = inlined_call_operand.vmem [shape: f32[1,150], index: 2, kind: input, shape index: {}]
  %s3 = inlined_call_operand.vmem [shape: f32[1,150], index: 3, kind: input, shape index: {}]
  %s4 = inlined_call_operand.vmem [shape: f32[16,150], index: 4, kind: input, shape index: {}]
  %s5 = inlined_call_operand.vmem [shape: bf16[150,128], index: 5, kind: input, shape index: {}]
  %s6 = inlined_call_operand.vmem [shape: f32[1,128], index: 6, kind: input, shape index: {}]
  %s7 = inlined_call_operand.hbm [shape: f32[32,128], index: 7, kind: output, shape index: {}]
  %s8 = sld [smem:[#allocation0]]
  $region42: #{tpu_custom_call.1} parent=0
    _
  %s10 = ssub.s32 1, %s8
  %s11 = scalar_select 0, %s10, %s8
  $region1: #{tpu_custom_call.1} parent=0
    #allocation2 [shape = 'u8[262144]{0}', space=vmem, size = 0x40000, scoped, tag = 'input window, operand 0, single buffered']
    #allocation3 [shape = 's32[1]{0}', space=sflag, size = 0x4, scoped, tag = 'scoped memory for tpu_custom_call.1']
    #allocation4 [shape = 's32[1]{0}', space=sflag, size = 0x4, scoped, tag = 'scoped memory for tpu_custom_call.1']
    #allocation5 [shape = 'u8[16384]{0}', space=vmem, size = 0x4000, scoped, tag = 'output window, operand 0, single buffered']
    %12 = vsyncpa [#allocation3], 0
    %13 = vsyncpa [#allocation4], 0
    // Predicated region
    $region2: #{tpu_custom_call.1} parent=1 // pred_check
      _
    $region3: #{tpu_custom_call.1} parent=1 // pred_check_branch
      %15 = sbr.rel (0) target = $region5
    $region4: #{tpu_custom_call.1} parent=1 // pred_region
      %17 = vsyncadd [#allocation3], 0
      %s18 = sshll.u32 %s0, 4
      %s19 = int_to_ptr.hbm [resolvable:$true] %s18
      %s20 = sshll.u32 [#allocation2], 4
      %s21 = int_to_ptr.vmem [resolvable:$true] %s20
      %26 = dma.hbm_to_vmem [thread:$0]  %s19, 8192, %s21, [#allocation3], 128, 128, 8
    $region5: #{tpu_custom_call.1} parent=1 // pred_fallthru
      _
    // Predicated region
    $region6: #{tpu_custom_call.1} parent=1 // pred_check
      _
    $region7: #{tpu_custom_call.1} parent=1 // pred_check_branch
      %28 = sbr.rel (0) target = $region9
    $region8: #{tpu_custom_call.1} parent=1 // pred_region
      _
    $region9: #{tpu_custom_call.1} parent=1 // pred_fallthru
      _
    // Predicated region
    $region10: #{tpu_custom_call.1} parent=1 // pred_check
      _
    $region11: #{tpu_custom_call.1} parent=1 // pred_check_branch
      %30 = sbr.rel (0) target = $region13
    $region12: #{tpu_custom_call.1} parent=1 // pred_region
      _
    $region13: #{tpu_custom_call.1} parent=1 // pred_fallthru
      _
    // Predicated region
    $region14: #{tpu_custom_call.1} parent=1 // pred_check
      _
    $region15: #{tpu_custom_call.1} parent=1 // pred_check_branch
      %32 = sbr.rel (0) target = $region17
    $region16: #{tpu_custom_call.1} parent=1 // pred_region
      _
    $region17: #{tpu_custom_call.1} parent=1 // pred_fallthru
      _
    // Predicated region
    $region18: #{tpu_custom_call.1} parent=1 // pred_check
      _
    $region19: #{tpu_custom_call.1} parent=1 // pred_check_branch
      %34 = sbr.rel (0) target = $region21
    $region20: #{tpu_custom_call.1} parent=1 // pred_region
      _
    $region21: #{tpu_custom_call.1} parent=1 // pred_fallthru
      _
    // Predicated region
    $region22: #{tpu_custom_call.1} parent=1 // pred_check
      _
    $region23: #{tpu_custom_call.1} parent=1 // pred_check_branch
      %36 = sbr.rel (0) target = $region25
    $region24: #{tpu_custom_call.1} parent=1 // pred_region
      _
    $region25: #{tpu_custom_call.1} parent=1 // pred_fallthru
      _
    // Predicated region
    $region26: #{tpu_custom_call.1} parent=1 // pred_check
      _
    $region27: #{tpu_custom_call.1} parent=1 // pred_check_branch
      %38 = sbr.rel (0) target = $region29
    $region28: #{tpu_custom_call.1} parent=1 // pred_region
      _
    $region29: #{tpu_custom_call.1} parent=1 // pred_fallthru
      _
    // Predicated region
    $region30: #{tpu_custom_call.1} parent=1 // pred_check
      _
    $region31: #{tpu_custom_call.1} parent=1 // pred_check_branch
      %40 = sbr.rel (0) target = $region33
    $region32: #{tpu_custom_call.1} parent=1 // pred_region
      %42 = dma.done [#allocation3], 8192
    $region33: #{tpu_custom_call.1} parent=1 // pred_fallthru
      _
    %v44 = vld [vmem:[#allocation2] sm:$0xff]
    %v45 = vld [vmem:[#allocation2 + $0x8] sm:$0xff]
    %v46 = vld [vmem:[#allocation2 + $0x10] sm:$0xff]
    %v47 = vld [vmem:[#allocation2 + $0x18] sm:$0xff]
    %v48 = vld [vmem:[#allocation2 + $0x20] sm:$0xff]
    %v49 = vld [vmem:[#allocation2 + $0x28] sm:$0xff]
    %v50 = vld [vmem:[#allocation2 + $0x30] sm:$0xff]
    %v51 = vld [vmem:[#allocation2 + $0x38] sm:$0xff]
    %v52 = vld [vmem:[#allocation2 + $0x40] sm:$0xff]
    %v53 = vld [vmem:[#allocation2 + $0x48] sm:$0xff]
    %v54 = vld [vmem:[#allocation2 + $0x50] sm:$0xff]
    %v55 = vld [vmem:[#allocation2 + $0x58] sm:$0xff]
    %v56 = vld [vmem:[#allocation2 + $0x60] sm:$0xff]
    %v57 = vld [vmem:[#allocation2 + $0x68] sm:$0xff]
    %v58 = vld [vmem:[#allocation2 + $0x70] sm:$0xff]
    %v59 = vld [vmem:[#allocation2 + $0x78] sm:$0xff]
    %v60 = vld [vmem:[#allocation2 + $0x80] sm:$0xff]
    %v61 = vld [vmem:[#allocation2 + $0x88] sm:$0xff]
    %v62 = vld [vmem:[#allocation2 + $0x90] sm:$0xff]
    %v63 = vld [vmem:[#allocation2 + $0x98] sm:$0xff]
    %v64 = vld [vmem:[#allocation2 + $0xa0] sm:$0xff]
    %v65 = vld [vmem:[#allocation2 + $0xa8] sm:$0xff]
    %v66 = vld [vmem:[#allocation2 + $0xb0] sm:$0xff]
    %v67 = vld [vmem:[#allocation2 + $0xb8] sm:$0xff]
    %v68 = vld [vmem:[#allocation2 + $0xc0] sm:$0xff]
    %v69 = vld [vmem:[#allocation2 + $0xc8] sm:$0xff]
    %v70 = vld [vmem:[#allocation2 + $0xd0] sm:$0xff]
    %v71 = vld [vmem:[#allocation2 + $0xd8] sm:$0xff]
    %v72 = vld [vmem:[#allocation2 + $0xe0] sm:$0xff]
    %v73 = vld [vmem:[#allocation2 + $0xe8] sm:$0xff]
    %v74 = vld [vmem:[#allocation2 + $0xf0] sm:$0xff]
    %v75 = vld [vmem:[#allocation2 + $0xf8] sm:$0xff]
    %v76 = vld [vmem:[#allocation2 + $0x100] sm:$0xff]
    %v77 = vld [vmem:[#allocation2 + $0x108] sm:$0xff]
    %v78 = vld [vmem:[#allocation2 + $0x110] sm:$0xff]
    %v79 = vld [vmem:[#allocation2 + $0x118] sm:$0xff]
    %v80 = vld [vmem:[#allocation2 + $0x120] sm:$0xff]
    %v81 = vld [vmem:[#allocation2 + $0x128] sm:$0xff]
    %v82 = vld [vmem:[#allocation2 + $0x130] sm:$0xff]
    %v83 = vld [vmem:[#allocation2 + $0x138] sm:$0xff]
    %v84 = vld [vmem:[#allocation2 + $0x140] sm:$0xff]
    %v85 = vld [vmem:[#allocation2 + $0x148] sm:$0xff]
    %v86 = vld [vmem:[#allocation2 + $0x150] sm:$0xff]
    %v87 = vld [vmem:[#allocation2 + $0x158] sm:$0xff]
    %v88 = vld [vmem:[#allocation2 + $0x160] sm:$0xff]
    %v89 = vld [vmem:[#allocation2 + $0x168] sm:$0xff]
    %v90 = vld [vmem:[#allocation2 + $0x170] sm:$0xff]
    %v91 = vld [vmem:[#allocation2 + $0x178] sm:$0xff]
    %v92 = vld [vmem:[#allocation2 + $0x180] sm:$0xff]
    %v93 = vld [vmem:[#allocation2 + $0x188] sm:$0xff]
    %v94 = vld [vmem:[#allocation2 + $0x190] sm:$0xff]
    %v95 = vld [vmem:[#allocation2 + $0x198] sm:$0xff]
    %v96 = vld [vmem:[#allocation2 + $0x1a0] sm:$0xff]
    %v97 = vld [vmem:[#allocation2 + $0x1a8] sm:$0xff]
    %v98 = vld [vmem:[#allocation2 + $0x1b0] sm:$0xff]
    %v99 = vld [vmem:[#allocation2 + $0x1b8] sm:$0xff]
    %v100 = vld [vmem:[#allocation2 + $0x1c0] sm:$0xff]
    %v101 = vld [vmem:[#allocation2 + $0x1c8] sm:$0xff]
    %v102 = vld [vmem:[#allocation2 + $0x1d0] sm:$0xff]
    %v103 = vld [vmem:[#allocation2 + $0x1d8] sm:$0xff]
    %v104 = vld [vmem:[#allocation2 + $0x1e0] sm:$0xff]
    %v105 = vld [vmem:[#allocation2 + $0x1e8] sm:$0xff]
    %v106 = vld [vmem:[#allocation2 + $0x1f0] sm:$0xff]
    %v107 = vld [vmem:[#allocation2 + $0x1f8] sm:$0xff]
    %v108 = vld [vmem:[%s1] sm:$0xff]
    %v109 = vld [vmem:[%s1 + $0x8] sm:$0xff]
    %v110 = vld [vmem:[%s1 + $0x10] sm:$0xff]
    %v111 = vld [vmem:[%s1 + $0x18] sm:$0xff]
    %v112 = vld [vmem:[%s1 + $0x20] sm:$0xff]
    %v113 = vld [vmem:[%s1 + $0x28] sm:$0xff]
    %v114 = vld [vmem:[%s1 + $0x30] sm:$0xff]
    %v115 = vld [vmem:[%s1 + $0x38] sm:$0xff]
    %v116 = vld [vmem:[%s1 + $0x40] sm:$0xff]
    %v117 = vld [vmem:[%s1 + $0x48] sm:$0xff]
    %v118 = vld [vmem:[%s1 + $0x50] sm:$0xff]
    %v119 = vld [vmem:[%s1 + $0x58] sm:$0xff]
    %v120 = vld [vmem:[%s1 + $0x60] sm:$0xff]
    %v121 = vld [vmem:[%s1 + $0x68] sm:$0xff]
    %v122 = vld [vmem:[%s1 + $0x70] sm:$0xff]
    %v123 = vld [vmem:[%s1 + $0x78] sm:$0xff]
    %v124 = vld [vmem:[%s1 + $0x80] sm:$0xff]
    %v125 = vld [vmem:[%s1 + $0x88] sm:$0xff]
    %v126 = vld [vmem:[%s1 + $0x90] sm:$0xff]
    %v127 = vld [vmem:[%s1 + $0x98] sm:$0xff]
    %v192 = vunpack.c.l.b16 %v44
    %v193 = vunpack.c.h.b16 %v44
    %v194 = vunpack.c.l.b16 %v45
    %v195 = vunpack.c.h.b16 %v45
    %v196 = vunpack.c.l.b16 %v46
    %v197 = vunpack.c.h.b16 %v46
    %v198 = vunpack.c.l.b16 %v47
    %v199 = vunpack.c.h.b16 %v47
    %v200 = vunpack.c.l.b16 %v48
    %v201 = vunpack.c.h.b16 %v48
    %v202 = vunpack.c.l.b16 %v49
    %v203 = vunpack.c.h.b16 %v49
    %v204 = vunpack.c.l.b16 %v50
    %v205 = vunpack.c.h.b16 %v50
    %v206 = vunpack.c.l.b16 %v51
    %v207 = vunpack.c.h.b16 %v51
    %v208 = vunpack.c.l.b16 %v52
    %v209 = vunpack.c.h.b16 %v52
    %v210 = vunpack.c.l.b16 %v53
    %v211 = vunpack.c.h.b16 %v53
    %v212 = vunpack.c.l.b16 %v54
    %v213 = vunpack.c.h.b16 %v54
    %v214 = vunpack.c.l.b16 %v55
    %v215 = vunpack.c.h.b16 %v55
    %v216 = vunpack.c.l.b16 %v56
    %v217 = vunpack.c.h.b16 %v56
    %v218 = vunpack.c.l.b16 %v57
    %v219 = vunpack.c.h.b16 %v57
    %v220 = vunpack.c.l.b16 %v58
    %v221 = vunpack.c.h.b16 %v58
    %v222 = vunpack.c.l.b16 %v59
    %v223 = vunpack.c.h.b16 %v59
    %v224 = vunpack.c.l.b16 %v60
    %v225 = vunpack.c.h.b16 %v60
    %v226 = vunpack.c.l.b16 %v61
    %v227 = vunpack.c.h.b16 %v61
    %v228 = vunpack.c.l.b16 %v62
    %v229 = vunpack.c.h.b16 %v62
    %v230 = vunpack.c.l.b16 %v63
    %v231 = vunpack.c.h.b16 %v63
    %v232 = vunpack.c.l.b16 %v64
    %v233 = vunpack.c.h.b16 %v64
    %v234 = vunpack.c.l.b16 %v65
    %v235 = vunpack.c.h.b16 %v65
    %v236 = vunpack.c.l.b16 %v66
    %v237 = vunpack.c.h.b16 %v66
    %v238 = vunpack.c.l.b16 %v67
    %v239 = vunpack.c.h.b16 %v67
    %v240 = vunpack.c.l.b16 %v68
    %v241 = vunpack.c.h.b16 %v68
    %v242 = vunpack.c.l.b16 %v69
    %v243 = vunpack.c.h.b16 %v69
    %v244 = vunpack.c.l.b16 %v70
    %v245 = vunpack.c.h.b16 %v70
    %v246 = vunpack.c.l.b16 %v71
    %v247 = vunpack.c.h.b16 %v71
    %v248 = vunpack.c.l.b16 %v72
    %v249 = vunpack.c.h.b16 %v72
    %v250 = vunpack.c.l.b16 %v73
    %v251 = vunpack.c.h.b16 %v73
    %v252 = vunpack.c.l.b16 %v74
    %v253 = vunpack.c.h.b16 %v74
    %v254 = vunpack.c.l.b16 %v75
    %v255 = vunpack.c.h.b16 %v75
    %v256 = vunpack.c.l.b16 %v76
    %v257 = vunpack.c.h.b16 %v76
    %v258 = vunpack.c.l.b16 %v77
    %v259 = vunpack.c.h.b16 %v77
    %v260 = vunpack.c.l.b16 %v78
    %v261 = vunpack.c.h.b16 %v78
    %v262 = vunpack.c.l.b16 %v79
    %v263 = vunpack.c.h.b16 %v79
    %v264 = vunpack.c.l.b16 %v80
    %v265 = vunpack.c.h.b16 %v80
    %v266 = vunpack.c.l.b16 %v81
    %v267 = vunpack.c.h.b16 %v81
    %v268 = vunpack.c.l.b16 %v82
    %v269 = vunpack.c.h.b16 %v82
    %v270 = vunpack.c.l.b16 %v83
    %v271 = vunpack.c.h.b16 %v83
    %v272 = vunpack.c.l.b16 %v84
    %v273 = vunpack.c.h.b16 %v84
    %v274 = vunpack.c.l.b16 %v85
    %v275 = vunpack.c.h.b16 %v85
    %v276 = vunpack.c.l.b16 %v86
    %v277 = vunpack.c.h.b16 %v86
    %v278 = vunpack.c.l.b16 %v87
    %v279 = vunpack.c.h.b16 %v87
    %v280 = vunpack.c.l.b16 %v88
    %v281 = vunpack.c.h.b16 %v88
    %v282 = vunpack.c.l.b16 %v89
    %v283 = vunpack.c.h.b16 %v89
    %v284 = vunpack.c.l.b16 %v90
    %v285 = vunpack.c.h.b16 %v90
    %v286 = vunpack.c.l.b16 %v91
    %v287 = vunpack.c.h.b16 %v91
    %v288 = vunpack.c.l.b16 %v92
    %v289 = vunpack.c.h.b16 %v92
    %v290 = vunpack.c.l.b16 %v93
    %v291 = vunpack.c.h.b16 %v93
    %v292 = vunpack.c.l.b16 %v94
    %v293 = vunpack.c.h.b16 %v94
    %v294 = vunpack.c.l.b16 %v95
    %v295 = vunpack.c.h.b16 %v95
    %v296 = vunpack.c.l.b16 %v96
    %v297 = vunpack.c.h.b16 %v96
    %v298 = vunpack.c.l.b16 %v97
    %v299 = vunpack.c.h.b16 %v97
    %v300 = vunpack.c.l.b16 %v98
    %v301 = vunpack.c.h.b16 %v98
    %v302 = vunpack.c.l.b16 %v99
    %v303 = vunpack.c.h.b16 %v99
    %v304 = vunpack.c.l.b16 %v100
    %v305 = vunpack.c.h.b16 %v100
    %v306 = vunpack.c.l.b16 %v101
    %v307 = vunpack.c.h.b16 %v101
    %v308 = vunpack.c.l.b16 %v102
    %v309 = vunpack.c.h.b16 %v102
    %v310 = vunpack.c.l.b16 %v103
    %v311 = vunpack.c.h.b16 %v103
    %v312 = vunpack.c.l.b16 %v104
    %v313 = vunpack.c.h.b16 %v104
    %v314 = vunpack.c.l.b16 %v105
    %v315 = vunpack.c.h.b16 %v105
    %v316 = vunpack.c.l.b16 %v106
    %v317 = vunpack.c.h.b16 %v106
    %v318 = vunpack.c.l.b16 %v107
    %v319 = vunpack.c.h.b16 %v107
    %v320 = vpack.c.b16 %v194, %v192
    %v321 = vpack.c.b16 %v195, %v193
    %v322 = vpack.c.b16 %v198, %v196
    %v323 = vpack.c.b16 %v199, %v197
    %v324 = vpack.c.b16 %v202, %v200
    %v325 = vpack.c.b16 %v203, %v201
    %v326 = vpack.c.b16 %v206, %v204
    %v327 = vpack.c.b16 %v207, %v205
    %v328 = vpack.c.b16 %v210, %v208
    %v329 = vpack.c.b16 %v211, %v209
    %v330 = vpack.c.b16 %v214, %v212
    %v331 = vpack.c.b16 %v215, %v213
    %v332 = vpack.c.b16 %v218, %v216
    %v333 = vpack.c.b16 %v219, %v217
    %v334 = vpack.c.b16 %v222, %v220
    %v335 = vpack.c.b16 %v223, %v221
    %v336 = vpack.c.b16 %v226, %v224
    %v337 = vpack.c.b16 %v227, %v225
    %v338 = vpack.c.b16 %v230, %v228
    %v339 = vpack.c.b16 %v231, %v229
    %v340 = vpack.c.b16 %v234, %v232
    %v341 = vpack.c.b16 %v235, %v233
    %v342 = vpack.c.b16 %v238, %v236
    %v343 = vpack.c.b16 %v239, %v237
    %v344 = vpack.c.b16 %v242, %v240
    %v345 = vpack.c.b16 %v243, %v241
    %v346 = vpack.c.b16 %v246, %v244
    %v347 = vpack.c.b16 %v247, %v245
    %v348 = vpack.c.b16 %v250, %v248
    %v349 = vpack.c.b16 %v251, %v249
    %v350 = vpack.c.b16 %v254, %v252
    %v351 = vpack.c.b16 %v255, %v253
    %v352 = vpack.c.b16 %v258, %v256
    %v353 = vpack.c.b16 %v259, %v257
    %v354 = vpack.c.b16 %v262, %v260
    %v355 = vpack.c.b16 %v263, %v261
    %v356 = vpack.c.b16 %v266, %v264
    %v357 = vpack.c.b16 %v267, %v265
    %v358 = vpack.c.b16 %v270, %v268
    %v359 = vpack.c.b16 %v271, %v269
    %v360 = vpack.c.b16 %v274, %v272
    %v361 = vpack.c.b16 %v275, %v273
    %v362 = vpack.c.b16 %v278, %v276
    %v363 = vpack.c.b16 %v279, %v277
    %v364 = vpack.c.b16 %v282, %v280
    %v365 = vpack.c.b16 %v283, %v281
    %v366 = vpack.c.b16 %v286, %v284
    %v367 = vpack.c.b16 %v287, %v285
    %v368 = vpack.c.b16 %v290, %v288
    %v369 = vpack.c.b16 %v291, %v289
    %v370 = vpack.c.b16 %v294, %v292
    %v371 = vpack.c.b16 %v295, %v293
    %v372 = vpack.c.b16 %v298, %v296
    %v373 = vpack.c.b16 %v299, %v297
    %v374 = vpack.c.b16 %v302, %v300
    %v375 = vpack.c.b16 %v303, %v301
    %v376 = vpack.c.b16 %v306, %v304
    %v377 = vpack.c.b16 %v307, %v305
    %v378 = vpack.c.b16 %v310, %v308
    %v379 = vpack.c.b16 %v311, %v309
    %v380 = vpack.c.b16 %v314, %v312
    %v381 = vpack.c.b16 %v315, %v313
    %v382 = vpack.c.b16 %v318, %v316
    %v383 = vpack.c.b16 %v319, %v317
    %v436 = vunpack.c.l.b16 %v108
    %v437 = vunpack.c.h.b16 %v108
    %v438 = vunpack.c.l.b16 %v109
    %v439 = vunpack.c.h.b16 %v109
    %v440 = vunpack.c.l.b16 %v110
    %v441 = vunpack.c.h.b16 %v110
    %v442 = vunpack.c.l.b16 %v111
    %v443 = vunpack.c.h.b16 %v111
    %v444 = vunpack.c.l.b16 %v112
    %v445 = vunpack.c.h.b16 %v112
    %v446 = vunpack.c.l.b16 %v113
    %v447 = vunpack.c.h.b16 %v113
    %v448 = vunpack.c.l.b16 %v114
    %v449 = vunpack.c.h.b16 %v114
    %v450 = vunpack.c.l.b16 %v115
    %v451 = vunpack.c.h.b16 %v115
    %v452 = vunpack.c.l.b16 %v116
    %v453 = vunpack.c.h.b16 %v116
    %v454 = vunpack.c.l.b16 %v117
    %v455 = vunpack.c.h.b16 %v117
    %v456 = vunpack.c.l.b16 %v118
    %v457 = vunpack.c.h.b16 %v118
    %v458 = vunpack.c.l.b16 %v119
    %v459 = vunpack.c.h.b16 %v119
    %v460 = vunpack.c.l.b16 %v120
    %v461 = vunpack.c.h.b16 %v120
    %v462 = vunpack.c.l.b16 %v121
    %v463 = vunpack.c.h.b16 %v121
    %v464 = vunpack.c.l.b16 %v122
    %v465 = vunpack.c.h.b16 %v122
    %v466 = vunpack.c.l.b16 %v123
    %v467 = vunpack.c.h.b16 %v123
    %v468 = vunpack.c.l.b16 %v124
    %v469 = vunpack.c.h.b16 %v124
    %v470 = vunpack.c.l.b16 %v125
    %v471 = vunpack.c.h.b16 %v125
    %v472 = vunpack.c.l.b16 %v126
    %v473 = vunpack.c.h.b16 %v126
    %v474 = vunpack.c.l.b16 %v127
    %v475 = vunpack.c.h.b16 %v127
    %v476 = vpack.c.b16 %v438, %v436
    %v477 = vpack.c.b16 %v439, %v437
    %v478 = vpack.c.b16 %v442, %v440
    %v479 = vpack.c.b16 %v443, %v441
    %v480 = vpack.c.b16 %v446, %v444
    %v481 = vpack.c.b16 %v447, %v445
    %v482 = vpack.c.b16 %v450, %v448
    %v483 = vpack.c.b16 %v451, %v449
    %v484 = vpack.c.b16 %v454, %v452
    %v485 = vpack.c.b16 %v455, %v453
    %v486 = vpack.c.b16 %v458, %v456
    %v487 = vpack.c.b16 %v459, %v457
    %v488 = vpack.c.b16 %v462, %v460
    %v489 = vpack.c.b16 %v463, %v461
    %v490 = vpack.c.b16 %v466, %v464
    %v491 = vpack.c.b16 %v467, %v465
    %v492 = vpack.c.b16 %v470, %v468
    %v493 = vpack.c.b16 %v471, %v469
    %v494 = vpack.c.b16 %v474, %v472
    %v495 = vpack.c.b16 %v475, %v473
    %vm516 = vcmask 261120
    %v518 = vsel %vm516, %v321, 0
    %v521 = vsel %vm516, %v323, 0
    %v524 = vsel %vm516, %v325, 0
    %v527 = vsel %vm516, %v327, 0
    %v530 = vsel %vm516, %v329, 0
    %v533 = vsel %vm516, %v331, 0
    %v536 = vsel %vm516, %v333, 0
    %v539 = vsel %vm516, %v335, 0
    %v542 = vsel %vm516, %v337, 0
    %v545 = vsel %vm516, %v339, 0
    %v548 = vsel %vm516, %v341, 0
    %v551 = vsel %vm516, %v343, 0
    %v554 = vsel %vm516, %v345, 0
    %v557 = vsel %vm516, %v347, 0
    %v560 = vsel %vm516, %v349, 0
    %v563 = vsel %vm516, %v351, 0
    %v566 = vsel %vm516, %v353, 0
    %v569 = vsel %vm516, %v355, 0
    %v572 = vsel %vm516, %v357, 0
    %v575 = vsel %vm516, %v359, 0
    %v578 = vsel %vm516, %v361, 0
    %v581 = vsel %vm516, %v363, 0
    %v584 = vsel %vm516, %v365, 0
    %v587 = vsel %vm516, %v367, 0
    %v590 = vsel %vm516, %v369, 0
    %v593 = vsel %vm516, %v371, 0
    %v596 = vsel %vm516, %v373, 0
    %v599 = vsel %vm516, %v375, 0
    %v602 = vsel %vm516, %v377, 0
    %v605 = vsel %vm516, %v379, 0
    %v608 = vsel %vm516, %v381, 0
    %v611 = vsel %vm516, %v383, 0
    %613 = vmatpush.bf16.msra.mxu0 %v490
    %614 = vmatpush.bf16.msra.mxu0 %v488
    %615 = vmatpush.bf16.msra.mxu0 %v486
    %616 = vmatpush.bf16.msra.mxu0 %v484
    %617 = vmatpush.bf16.msra.mxu0 %v482
    %618 = vmatpush.bf16.msra.mxu0 %v480
    %619 = vmatpush.bf16.msra.mxu0 %v478
    %620 = vmatpush.bf16.msra.mxu0 %v476
    %621 = vmatmul.bf16.gmra.mxu0 %v320
    %v622 = vpop.f32.mrf.mxu0
    %v623 = vadd.f32 0.0, %v622
    %v624 = vpop.f32.mrf.mxu0
    %v625 = vadd.f32 0.0, %v624
    %626 = vmatmul.bf16.gmra.mxu0 %v322
    %v627 = vpop.f32.mrf.mxu0
    %v628 = vadd.f32 0.0, %v627
    %v629 = vpop.f32.mrf.mxu0
    %v630 = vadd.f32 0.0, %v629
    %631 = vmatmul.bf16.gmra.mxu0 %v324
    %v632 = vpop.f32.mrf.mxu0
    %v633 = vadd.f32 0.0, %v632
    %v634 = vpop.f32.mrf.mxu0
    %v635 = vadd.f32 0.0, %v634
    %636 = vmatmul.bf16.gmra.mxu0 %v326
    %v637 = vpop.f32.mrf.mxu0
    %v638 = vadd.f32 0.0, %v637
    %v639 = vpop.f32.mrf.mxu0
    %v640 = vadd.f32 0.0, %v639
    %641 = vmatmul.bf16.gmra.mxu0 %v328
    %v642 = vpop.f32.mrf.mxu0
    %v643 = vadd.f32 0.0, %v642
    %v644 = vpop.f32.mrf.mxu0
    %v645 = vadd.f32 0.0, %v644
    %646 = vmatmul.bf16.gmra.mxu0 %v330
    %v647 = vpop.f32.mrf.mxu0
    %v648 = vadd.f32 0.0, %v647
    %v649 = vpop.f32.mrf.mxu0
    %v650 = vadd.f32 0.0, %v649
    %651 = vmatmul.bf16.gmra.mxu0 %v332
    %v652 = vpop.f32.mrf.mxu0
    %v653 = vadd.f32 0.0, %v652
    %v654 = vpop.f32.mrf.mxu0
    %v655 = vadd.f32 0.0, %v654
    %656 = vmatmul.bf16.gmra.mxu0 %v334
    %v657 = vpop.f32.mrf.mxu0
    %v658 = vadd.f32 0.0, %v657
    %v659 = vpop.f32.mrf.mxu0
    %v660 = vadd.f32 0.0, %v659
    %661 = vmatmul.bf16.gmra.mxu0 %v336
    %v662 = vpop.f32.mrf.mxu0
    %v663 = vadd.f32 0.0, %v662
    %v664 = vpop.f32.mrf.mxu0
    %v665 = vadd.f32 0.0, %v664
    %666 = vmatmul.bf16.gmra.mxu0 %v338
    %v667 = vpop.f32.mrf.mxu0
    %v668 = vadd.f32 0.0, %v667
    %v669 = vpop.f32.mrf.mxu0
    %v670 = vadd.f32 0.0, %v669
    %671 = vmatmul.bf16.gmra.mxu0 %v340
    %v672 = vpop.f32.mrf.mxu0
    %v673 = vadd.f32 0.0, %v672
    %v674 = vpop.f32.mrf.mxu0
    %v675 = vadd.f32 0.0, %v674
    %676 = vmatmul.bf16.gmra.mxu0 %v342
    %v677 = vpop.f32.mrf.mxu0
    %v678 = vadd.f32 0.0, %v677
    %v679 = vpop.f32.mrf.mxu0
    %v680 = vadd.f32 0.0, %v679
    %681 = vmatmul.bf16.gmra.mxu0 %v344
    %v682 = vpop.f32.mrf.mxu0
    %v683 = vadd.f32 0.0, %v682
    %v684 = vpop.f32.mrf.mxu0
    %v685 = vadd.f32 0.0, %v684
    %686 = vmatmul.bf16.gmra.mxu0 %v346
    %v687 = vpop.f32.mrf.mxu0
    %v688 = vadd.f32 0.0, %v687
    %v689 = vpop.f32.mrf.mxu0
    %v690 = vadd.f32 0.0, %v689
    %691 = vmatmul.bf16.gmra.mxu0 %v348
    %v692 = vpop.f32.mrf.mxu0
    %v693 = vadd.f32 0.0, %v692
    %v694 = vpop.f32.mrf.mxu0
    %v695 = vadd.f32 0.0, %v694
    %696 = vmatmul.bf16.gmra.mxu0 %v350
    %v697 = vpop.f32.mrf.mxu0
    %v698 = vadd.f32 0.0, %v697
    %v699 = vpop.f32.mrf.mxu0
    %v700 = vadd.f32 0.0, %v699
    %701 = vmatmul.bf16.gmra.mxu0 %v352
    %v702 = vpop.f32.mrf.mxu0
    %v703 = vadd.f32 0.0, %v702
    %v704 = vpop.f32.mrf.mxu0
    %v705 = vadd.f32 0.0, %v704
    %706 = vmatmul.bf16.gmra.mxu0 %v354
    %v707 = vpop.f32.mrf.mxu0
    %v708 = vadd.f32 0.0, %v707
    %v709 = vpop.f32.mrf.mxu0
    %v710 = vadd.f32 0.0, %v709
    %711 = vmatmul.bf16.gmra.mxu0 %v356
    %v712 = vpop.f32.mrf.mxu0
    %v713 = vadd.f32 0.0, %v712
    %v714 = vpop.f32.mrf.mxu0
    %v715 = vadd.f32 0.0, %v714
    %716 = vmatmul.bf16.gmra.mxu0 %v358
    %v717 = vpop.f32.mrf.mxu0
    %v718 = vadd.f32 0.0, %v717
    %v719 = vpop.f32.mrf.mxu0
    %v720 = vadd.f32 0.0, %v719
    %721 = vmatmul.bf16.gmra.mxu0 %v360
    %v722 = vpop.f32.mrf.mxu0
    %v723 = vadd.f32 0.0, %v722
    %v724 = vpop.f32.mrf.mxu0
    %v725 = vadd.f32 0.0, %v724
    %726 = vmatmul.bf16.gmra.mxu0 %v362
    %v727 = vpop.f32.mrf.mxu0
    %v728 = vadd.f32 0.0, %v727
    %v729 = vpop.f32.mrf.mxu0
    %v730 = vadd.f32 0.0, %v729
    %731 = vmatmul.bf16.gmra.mxu0 %v364
    %v732 = vpop.f32.mrf.mxu0
    %v733 = vadd.f32 0.0, %v732
    %v734 = vpop.f32.mrf.mxu0
    %v735 = vadd.f32 0.0, %v734
    %736 = vmatmul.bf16.gmra.mxu0 %v366
    %v737 = vpop.f32.mrf.mxu0
    %v738 = vadd.f32 0.0, %v737
    %v739 = vpop.f32.mrf.mxu0
    %v740 = vadd.f32 0.0, %v739
    %741 = vmatmul.bf16.gmra.mxu0 %v368
    %v742 = vpop.f32.mrf.mxu0
    %v743 = vadd.f32 0.0, %v742
    %v744 = vpop.f32.mrf.mxu0
    %v745 = vadd.f32 0.0, %v744
    %746 = vmatmul.bf16.gmra.mxu0 %v370
    %v747 = vpop.f32.mrf.mxu0
    %v748 = vadd.f32 0.0, %v747
    %v749 = vpop.f32.mrf.mxu0
    %v750 = vadd.f32 0.0, %v749
    %751 = vmatmul.bf16.gmra.mxu0 %v372
    %v752 = vpop.f32.mrf.mxu0
    %v753 = vadd.f32 0.0, %v752
    %v754 = vpop.f32.mrf.mxu0
    %v755 = vadd.f32 0.0, %v754
    %756 = vmatmul.bf16.gmra.mxu0 %v374
    %v757 = vpop.f32.mrf.mxu0
    %v758 = vadd.f32 0.0, %v757
    %v759 = vpop.f32.mrf.mxu0
    %v760 = vadd.f32 0.0, %v759
    %761 = vmatmul.bf16.gmra.mxu0 %v376
    %v762 = vpop.f32.mrf.mxu0
    %v763 = vadd.f32 0.0, %v762
    %v764 = vpop.f32.mrf.mxu0
    %v765 = vadd.f32 0.0, %v764
    %766 = vmatmul.bf16.gmra.mxu0 %v378
    %v767 = vpop.f32.mrf.mxu0
    %v768 = vadd.f32 0.0, %v767
    %v769 = vpop.f32.mrf.mxu0
    %v770 = vadd.f32 0.0, %v769
    %771 = vmatmul.bf16.gmra.mxu0 %v380
    %v772 = vpop.f32.mrf.mxu0
    %v773 = vadd.f32 0.0, %v772
    %v774 = vpop.f32.mrf.mxu0
    %v775 = vadd.f32 0.0, %v774
    %776 = vmatmul.bf16.gmra.mxu0 %v382
    %v777 = vpop.f32.mrf.mxu0
    %v778 = vadd.f32 0.0, %v777
    %v779 = vpop.f32.mrf.mxu0
    %v780 = vadd.f32 0.0, %v779
    %781 = vdwg.mxu0
    %782 = vmatpush.bf16.msra.mxu0 0
    %783 = vmatpush.bf16.msra.mxu0 0
    %784 = vmatpush.bf16.msra.mxu0 0
    %785 = vmatpush.bf16.msra.mxu0 0
    %786 = vmatpush.bf16.msra.mxu0 0
    %787 = vmatpush.bf16.msra.mxu0 0
    %788 = vmatpush.bf16.msra.mxu0 %v494
    %789 = vmatpush.bf16.msra.mxu0 %v492
    %790 = vmatmul.bf16.gmra.mxu0 %v518
    %v791 = vpop.f32.mrf.mxu0
    %v792 = vadd.f32 %v623, %v791
    %v793 = vpop.f32.mrf.mxu0
    %v794 = vadd.f32 %v625, %v793
    %795 = vmatmul.bf16.gmra.mxu0 %v521
    %v796 = vpop.f32.mrf.mxu0
    %v797 = vadd.f32 %v628, %v796
    %v798 = vpop.f32.mrf.mxu0
    %v799 = vadd.f32 %v630, %v798
    %800 = vmatmul.bf16.gmra.mxu0 %v524
    %v801 = vpop.f32.mrf.mxu0
    %v802 = vadd.f32 %v633, %v801
    %v803 = vpop.f32.mrf.mxu0
    %v804 = vadd.f32 %v635, %v803
    %805 = vmatmul.bf16.gmra.mxu0 %v527
    %v806 = vpop.f32.mrf.mxu0
    %v807 = vadd.f32 %v638, %v806
    %v808 = vpop.f32.mrf.mxu0
    %v809 = vadd.f32 %v640, %v808
    %810 = vmatmul.bf16.gmra.mxu0 %v530
    %v811 = vpop.f32.mrf.mxu0
    %v812 = vadd.f32 %v643, %v811
    %v813 = vpop.f32.mrf.mxu0
    %v814 = vadd.f32 %v645, %v813
    %815 = vmatmul.bf16.gmra.mxu0 %v533
    %v816 = vpop.f32.mrf.mxu0
    %v817 = vadd.f32 %v648, %v816
    %v818 = vpop.f32.mrf.mxu0
    %v819 = vadd.f32 %v650, %v818
    %820 = vmatmul.bf16.gmra.mxu0 %v536
    %v821 = vpop.f32.mrf.mxu0
    %v822 = vadd.f32 %v653, %v821
    %v823 = vpop.f32.mrf.mxu0
    %v824 = vadd.f32 %v655, %v823
    %825 = vmatmul.bf16.gmra.mxu0 %v539
    %v826 = vpop.f32.mrf.mxu0
    %v827 = vadd.f32 %v658, %v826
    %v828 = vpop.f32.mrf.mxu0
    %v829 = vadd.f32 %v660, %v828
    %830 = vmatmul.bf16.gmra.mxu0 %v542
    %v831 = vpop.f32.mrf.mxu0
    %v832 = vadd.f32 %v663, %v831
    %v833 = vpop.f32.mrf.mxu0
    %v834 = vadd.f32 %v665, %v833
    %835 = vmatmul.bf16.gmra.mxu0 %v545
    %v836 = vpop.f32.mrf.mxu0
    %v837 = vadd.f32 %v668, %v836
    %v838 = vpop.f32.mrf.mxu0
    %v839 = vadd.f32 %v670, %v838
    %840 = vmatmul.bf16.gmra.mxu0 %v548
    %v841 = vpop.f32.mrf.mxu0
    %v842 = vadd.f32 %v673, %v841
    %v843 = vpop.f32.mrf.mxu0
    %v844 = vadd.f32 %v675, %v843
    %845 = vmatmul.bf16.gmra.mxu0 %v551
    %v846 = vpop.f32.mrf.mxu0
    %v847 = vadd.f32 %v678, %v846
    %v848 = vpop.f32.mrf.mxu0
    %v849 = vadd.f32 %v680, %v848
    %850 = vmatmul.bf16.gmra.mxu0 %v554
    %v851 = vpop.f32.mrf.mxu0
    %v852 = vadd.f32 %v683, %v851
    %v853 = vpop.f32.mrf.mxu0
    %v854 = vadd.f32 %v685, %v853
    %855 = vmatmul.bf16.gmra.mxu0 %v557
    %v856 = vpop.f32.mrf.mxu0
    %v857 = vadd.f32 %v688, %v856
    %v858 = vpop.f32.mrf.mxu0
    %v859 = vadd.f32 %v690, %v858
    %860 = vmatmul.bf16.gmra.mxu0 %v560
    %v861 = vpop.f32.mrf.mxu0
    %v862 = vadd.f32 %v693, %v861
    %v863 = vpop.f32.mrf.mxu0
    %v864 = vadd.f32 %v695, %v863
    %865 = vmatmul.bf16.gmra.mxu0 %v563
    %v866 = vpop.f32.mrf.mxu0
    %v867 = vadd.f32 %v698, %v866
    %v868 = vpop.f32.mrf.mxu0
    %v869 = vadd.f32 %v700, %v868
    %870 = vmatmul.bf16.gmra.mxu0 %v566
    %v871 = vpop.f32.mrf.mxu0
    %v872 = vadd.f32 %v703, %v871
    %v873 = vpop.f32.mrf.mxu0
    %v874 = vadd.f32 %v705, %v873
    %875 = vmatmul.bf16.gmra.mxu0 %v569
    %v876 = vpop.f32.mrf.mxu0
    %v877 = vadd.f32 %v708, %v876
    %v878 = vpop.f32.mrf.mxu0
    %v879 = vadd.f32 %v710, %v878
    %880 = vmatmul.bf16.gmra.mxu0 %v572
    %v881 = vpop.f32.mrf.mxu0
    %v882 = vadd.f32 %v713, %v881
    %v883 = vpop.f32.mrf.mxu0
    %v884 = vadd.f32 %v715, %v883
    %885 = vmatmul.bf16.gmra.mxu0 %v575
    %v886 = vpop.f32.mrf.mxu0
    %v887 = vadd.f32 %v718, %v886
    %v888 = vpop.f32.mrf.mxu0
    %v889 = vadd.f32 %v720, %v888
    %890 = vmatmul.bf16.gmra.mxu0 %v578
    %v891 = vpop.f32.mrf.mxu0
    %v892 = vadd.f32 %v723, %v891
    %v893 = vpop.f32.mrf.mxu0
    %v894 = vadd.f32 %v725, %v893
    %895 = vmatmul.bf16.gmra.mxu0 %v581
    %v896 = vpop.f32.mrf.mxu0
    %v897 = vadd.f32 %v728, %v896
    %v898 = vpop.f32.mrf.mxu0
    %v899 = vadd.f32 %v730, %v898
    %900 = vmatmul.bf16.gmra.mxu0 %v584
    %v901 = vpop.f32.mrf.mxu0
    %v902 = vadd.f32 %v733, %v901
    %v903 = vpop.f32.mrf.mxu0
    %v904 = vadd.f32 %v735, %v903
    %905 = vmatmul.bf16.gmra.mxu0 %v587
    %v906 = vpop.f32.mrf.mxu0
    %v907 = vadd.f32 %v738, %v906
    %v908 = vpop.f32.mrf.mxu0
    %v909 = vadd.f32 %v740, %v908
    %910 = vmatmul.bf16.gmra.mxu0 %v590
    %v911 = vpop.f32.mrf.mxu0
    %v912 = vadd.f32 %v743, %v911
    %v913 = vpop.f32.mrf.mxu0
    %v914 = vadd.f32 %v745, %v913
    %915 = vmatmul.bf16.gmra.mxu0 %v593
    %v916 = vpop.f32.mrf.mxu0
    %v917 = vadd.f32 %v748, %v916
    %v918 = vpop.f32.mrf.mxu0
    %v919 = vadd.f32 %v750, %v918
    %920 = vmatmul.bf16.gmra.mxu0 %v596
    %v921 = vpop.f32.mrf.mxu0
    %v922 = vadd.f32 %v753, %v921
    %v923 = vpop.f32.mrf.mxu0
    %v924 = vadd.f32 %v755, %v923
    %925 = vmatmul.bf16.gmra.mxu0 %v599
    %v926 = vpop.f32.mrf.mxu0
    %v927 = vadd.f32 %v758, %v926
    %v928 = vpop.f32.mrf.mxu0
    %v929 = vadd.f32 %v760, %v928
    %930 = vmatmul.bf16.gmra.mxu0 %v602
    %v931 = vpop.f32.mrf.mxu0
    %v932 = vadd.f32 %v763, %v931
    %v933 = vpop.f32.mrf.mxu0
    %v934 = vadd.f32 %v765, %v933
    %935 = vmatmul.bf16.gmra.mxu0 %v605
    %v936 = vpop.f32.mrf.mxu0
    %v937 = vadd.f32 %v768, %v936
    %v938 = vpop.f32.mrf.mxu0
    %v939 = vadd.f32 %v770, %v938
    %940 = vmatmul.bf16.gmra.mxu0 %v608
    %v941 = vpop.f32.mrf.mxu0
    %v942 = vadd.f32 %v773, %v941
    %v943 = vpop.f32.mrf.mxu0
    %v944 = vadd.f32 %v775, %v943
    %945 = vmatmul.bf16.gmra.mxu0 %v611
    %v946 = vpop.f32.mrf.mxu0
    %v947 = vadd.f32 %v778, %v946
    %v948 = vpop.f32.mrf.mxu0
    %v949 = vadd.f32 %v780, %v948
    %950 = vdwg.mxu0
    %951 = vmatpush.bf16.msra.mxu0 %v491
    %952 = vmatpush.bf16.msra.mxu0 %v489
    %953 = vmatpush.bf16.msra.mxu0 %v487
    %954 = vmatpush.bf16.msra.mxu0 %v485
    %955 = vmatpush.bf16.msra.mxu0 %v483
    %956 = vmatpush.bf16.msra.mxu0 %v481
    %957 = vmatpush.bf16.msra.mxu0 %v479
    %958 = vmatpush.bf16.msra.mxu0 %v477
    %959 = vmatmul.bf16.gmra.mxu0 %v320
    %v960 = vpop.f32.mrf.mxu0
    %v961 = vadd.f32 0.0, %v960
    %v962 = vpop.f32.mrf.mxu0
    %v963 = vadd.f32 0.0, %v962
    %964 = vmatmul.bf16.gmra.mxu0 %v322
    %v965 = vpop.f32.mrf.mxu0
    %v966 = vadd.f32 0.0, %v965
    %v967 = vpop.f32.mrf.mxu0
    %v968 = vadd.f32 0.0, %v967
    %969 = vmatmul.bf16.gmra.mxu0 %v324
    %v970 = vpop.f32.mrf.mxu0
    %v971 = vadd.f32 0.0, %v970
    %v972 = vpop.f32.mrf.mxu0
    %v973 = vadd.f32 0.0, %v972
    %974 = vmatmul.bf16.gmra.mxu0 %v326
    %v975 = vpop.f32.mrf.mxu0
    %v976 = vadd.f32 0.0, %v975
    %v977 = vpop.f32.mrf.mxu0
    %v978 = vadd.f32 0.0, %v977
    %979 = vmatmul.bf16.gmra.mxu0 %v328
    %v980 = vpop.f32.mrf.mxu0
    %v981 = vadd.f32 0.0, %v980
    %v982 = vpop.f32.mrf.mxu0
    %v983 = vadd.f32 0.0, %v982
    %984 = vmatmul.bf16.gmra.mxu0 %v330
    %v985 = vpop.f32.mrf.mxu0
    %v986 = vadd.f32 0.0, %v985
    %v987 = vpop.f32.mrf.mxu0
    %v988 = vadd.f32 0.0, %v987
    %989 = vmatmul.bf16.gmra.mxu0 %v332
    %v990 = vpop.f32.mrf.mxu0
    %v991 = vadd.f32 0.0, %v990
    %v992 = vpop.f32.mrf.mxu0
    %v993 = vadd.f32 0.0, %v992
    %994 = vmatmul.bf16.gmra.mxu0 %v334
    %v995 = vpop.f32.mrf.mxu0
    %v996 = vadd.f32 0.0, %v995
    %v997 = vpop.f32.mrf.mxu0
    %v998 = vadd.f32 0.0, %v997
    %999 = vmatmul.bf16.gmra.mxu0 %v336
    %v1000 = vpop.f32.mrf.mxu0
    %v1001 = vadd.f32 0.0, %v1000
    %v1002 = vpop.f32.mrf.mxu0
    %v1003 = vadd.f32 0.0, %v1002
    %1004 = vmatmul.bf16.gmra.mxu0 %v338
    %v1005 = vpop.f32.mrf.mxu0
    %v1006 = vadd.f32 0.0, %v1005
    %v1007 = vpop.f32.mrf.mxu0
    %v1008 = vadd.f32 0.0, %v1007
    %1009 = vmatmul.bf16.gmra.mxu0 %v340
    %v1010 = vpop.f32.mrf.mxu0
    %v1011 = vadd.f32 0.0, %v1010
    %v1012 = vpop.f32.mrf.mxu0
    %v1013 = vadd.f32 0.0, %v1012
    %1014 = vmatmul.bf16.gmra.mxu0 %v342
    %v1015 = vpop.f32.mrf.mxu0
    %v1016 = vadd.f32 0.0, %v1015
    %v1017 = vpop.f32.mrf.mxu0
    %v1018 = vadd.f32 0.0, %v1017
    %1019 = vmatmul.bf16.gmra.mxu0 %v344
    %v1020 = vpop.f32.mrf.mxu0
    %v1021 = vadd.f32 0.0, %v1020
    %v1022 = vpop.f32.mrf.mxu0
    %v1023 = vadd.f32 0.0, %v1022
    %1024 = vmatmul.bf16.gmra.mxu0 %v346
    %v1025 = vpop.f32.mrf.mxu0
    %v1026 = vadd.f32 0.0, %v1025
    %v1027 = vpop.f32.mrf.mxu0
    %v1028 = vadd.f32 0.0, %v1027
    %1029 = vmatmul.bf16.gmra.mxu0 %v348
    %v1030 = vpop.f32.mrf.mxu0
    %v1031 = vadd.f32 0.0, %v1030
    %v1032 = vpop.f32.mrf.mxu0
    %v1033 = vadd.f32 0.0, %v1032
    %1034 = vmatmul.bf16.gmra.mxu0 %v350
    %v1035 = vpop.f32.mrf.mxu0
    %v1036 = vadd.f32 0.0, %v1035
    %v1037 = vpop.f32.mrf.mxu0
    %v1038 = vadd.f32 0.0, %v1037
    %1039 = vmatmul.bf16.gmra.mxu0 %v352
    %v1040 = vpop.f32.mrf.mxu0
    %v1041 = vadd.f32 0.0, %v1040
    %v1042 = vpop.f32.mrf.mxu0
    %v1043 = vadd.f32 0.0, %v1042
    %1044 = vmatmul.bf16.gmra.mxu0 %v354
    %v1045 = vpop.f32.mrf.mxu0
    %v1046 = vadd.f32 0.0, %v1045
    %v1047 = vpop.f32.mrf.mxu0
    %v1048 = vadd.f32 0.0, %v1047
    %1049 = vmatmul.bf16.gmra.mxu0 %v356
    %v1050 = vpop.f32.mrf.mxu0
    %v1051 = vadd.f32 0.0, %v1050
    %v1052 = vpop.f32.mrf.mxu0
    %v1053 = vadd.f32 0.0, %v1052
    %1054 = vmatmul.bf16.gmra.mxu0 %v358
    %v1055 = vpop.f32.mrf.mxu0
    %v1056 = vadd.f32 0.0, %v1055
    %v1057 = vpop.f32.mrf.mxu0
    %v1058 = vadd.f32 0.0, %v1057
    %1059 = vmatmul.bf16.gmra.mxu0 %v360
    %v1060 = vpop.f32.mrf.mxu0
    %v1061 = vadd.f32 0.0, %v1060
    %v1062 = vpop.f32.mrf.mxu0
    %v1063 = vadd.f32 0.0, %v1062
    %1064 = vmatmul.bf16.gmra.mxu0 %v362
    %v1065 = vpop.f32.mrf.mxu0
    %v1066 = vadd.f32 0.0, %v1065
    %v1067 = vpop.f32.mrf.mxu0
    %v1068 = vadd.f32 0.0, %v1067
    %1069 = vmatmul.bf16.gmra.mxu0 %v364
    %v1070 = vpop.f32.mrf.mxu0
    %v1071 = vadd.f32 0.0, %v1070
    %v1072 = vpop.f32.mrf.mxu0
    %v1073 = vadd.f32 0.0, %v1072
    %1074 = vmatmul.bf16.gmra.mxu0 %v366
    %v1075 = vpop.f32.mrf.mxu0
    %v1076 = vadd.f32 0.0, %v1075
    %v1077 = vpop.f32.mrf.mxu0
    %v1078 = vadd.f32 0.0, %v1077
    %1079 = vmatmul.bf16.gmra.mxu0 %v368
    %v1080 = vpop.f32.mrf.mxu0
    %v1081 = vadd.f32 0.0, %v1080
    %v1082 = vpop.f32.mrf.mxu0
    %v1083 = vadd.f32 0.0, %v1082
    %1084 = vmatmul.bf16.gmra.mxu0 %v370
    %v1085 = vpop.f32.mrf.mxu0
    %v1086 = vadd.f32 0.0, %v1085
    %v1087 = vpop.f32.mrf.mxu0
    %v1088 = vadd.f32 0.0, %v1087
    %1089 = vmatmul.bf16.gmra.mxu0 %v372
    %v1090 = vpop.f32.mrf.mxu0
    %v1091 = vadd.f32 0.0, %v1090
    %v1092 = vpop.f32.mrf.mxu0
    %v1093 = vadd.f32 0.0, %v1092
    %1094 = vmatmul.bf16.gmra.mxu0 %v374
    %v1095 = vpop.f32.mrf.mxu0
    %v1096 = vadd.f32 0.0, %v1095
    %v1097 = vpop.f32.mrf.mxu0
    %v1098 = vadd.f32 0.0, %v1097
    %1099 = vmatmul.bf16.gmra.mxu0 %v376
    %v1100 = vpop.f32.mrf.mxu0
    %v1101 = vadd.f32 0.0, %v1100
    %v1102 = vpop.f32.mrf.mxu0
    %v1103 = vadd.f32 0.0, %v1102
    %1104 = vmatmul.bf16.gmra.mxu0 %v378
    %v1105 = vpop.f32.mrf.mxu0
    %v1106 = vadd.f32 0.0, %v1105
    %v1107 = vpop.f32.mrf.mxu0
    %v1108 = vadd.f32 0.0, %v1107
    %1109 = vmatmul.bf16.gmra.mxu0 %v380
    %v1110 = vpop.f32.mrf.mxu0
    %v1111 = vadd.f32 0.0, %v1110
    %v1112 = vpop.f32.mrf.mxu0
    %v1113 = vadd.f32 0.0, %v1112
    %1114 = vmatmul.bf16.gmra.mxu0 %v382
    %v1115 = vpop.f32.mrf.mxu0
    %v1116 = vadd.f32 0.0, %v1115
    %v1117 = vpop.f32.mrf.mxu0
    %v1118 = vadd.f32 0.0, %v1117
    %1119 = vdwg.mxu0
    %1120 = vmatpush.bf16.msra.mxu0 0
    %1121 = vmatpush.bf16.msra.mxu0 0
    %1122 = vmatpush.bf16.msra.mxu0 0
    %1123 = vmatpush.bf16.msra.mxu0 0
    %1124 = vmatpush.bf16.msra.mxu0 0
    %1125 = vmatpush.bf16.msra.mxu0 0
    %1126 = vmatpush.bf16.msra.mxu0 %v495
    %1127 = vmatpush.bf16.msra.mxu0 %v493
    %1128 = vmatmul.bf16.gmra.mxu0 %v518
    %v1129 = vpop.f32.mrf.mxu0
    %v1130 = vadd.f32 %v961, %v1129
    %v1131 = vpop.f32.mrf.mxu0
    %v1132 = vadd.f32 %v963, %v1131
    %1133 = vmatmul.bf16.gmra.mxu0 %v521
    %v1134 = vpop.f32.mrf.mxu0
    %v1135 = vadd.f32 %v966, %v1134
    %v1136 = vpop.f32.mrf.mxu0
    %v1137 = vadd.f32 %v968, %v1136
    %1138 = vmatmul.bf16.gmra.mxu0 %v524
    %v1139 = vpop.f32.mrf.mxu0
    %v1140 = vadd.f32 %v971, %v1139
    %v1141 = vpop.f32.mrf.mxu0
    %v1142 = vadd.f32 %v973, %v1141
    %1143 = vmatmul.bf16.gmra.mxu0 %v527
    %v1144 = vpop.f32.mrf.mxu0
    %v1145 = vadd.f32 %v976, %v1144
    %v1146 = vpop.f32.mrf.mxu0
    %v1147 = vadd.f32 %v978, %v1146
    %1148 = vmatmul.bf16.gmra.mxu0 %v530
    %v1149 = vpop.f32.mrf.mxu0
    %v1150 = vadd.f32 %v981, %v1149
    %v1151 = vpop.f32.mrf.mxu0
    %v1152 = vadd.f32 %v983, %v1151
    %1153 = vmatmul.bf16.gmra.mxu0 %v533
    %v1154 = vpop.f32.mrf.mxu0
    %v1155 = vadd.f32 %v986, %v1154
    %v1156 = vpop.f32.mrf.mxu0
    %v1157 = vadd.f32 %v988, %v1156
    %1158 = vmatmul.bf16.gmra.mxu0 %v536
    %v1159 = vpop.f32.mrf.mxu0
    %v1160 = vadd.f32 %v991, %v1159
    %v1161 = vpop.f32.mrf.mxu0
    %v1162 = vadd.f32 %v993, %v1161
    %1163 = vmatmul.bf16.gmra.mxu0 %v539
    %v1164 = vpop.f32.mrf.mxu0
    %v1165 = vadd.f32 %v996, %v1164
    %v1166 = vpop.f32.mrf.mxu0
    %v1167 = vadd.f32 %v998, %v1166
    %1168 = vmatmul.bf16.gmra.mxu0 %v542
    %v1169 = vpop.f32.mrf.mxu0
    %v1170 = vadd.f32 %v1001, %v1169
    %v1171 = vpop.f32.mrf.mxu0
    %v1172 = vadd.f32 %v1003, %v1171
    %1173 = vmatmul.bf16.gmra.mxu0 %v545
    %v1174 = vpop.f32.mrf.mxu0
    %v1175 = vadd.f32 %v1006, %v1174
    %v1176 = vpop.f32.mrf.mxu0
    %v1177 = vadd.f32 %v1008, %v1176
    %1178 = vmatmul.bf16.gmra.mxu0 %v548
    %v1179 = vpop.f32.mrf.mxu0
    %v1180 = vadd.f32 %v1011, %v1179
    %v1181 = vpop.f32.mrf.mxu0
    %v1182 = vadd.f32 %v1013, %v1181
    %1183 = vmatmul.bf16.gmra.mxu0 %v551
    %v1184 = vpop.f32.mrf.mxu0
    %v1185 = vadd.f32 %v1016, %v1184
    %v1186 = vpop.f32.mrf.mxu0
    %v1187 = vadd.f32 %v1018, %v1186
    %1188 = vmatmul.bf16.gmra.mxu0 %v554
    %v1189 = vpop.f32.mrf.mxu0
    %v1190 = vadd.f32 %v1021, %v1189
    %v1191 = vpop.f32.mrf.mxu0
    %v1192 = vadd.f32 %v1023, %v1191
    %1193 = vmatmul.bf16.gmra.mxu0 %v557
    %v1194 = vpop.f32.mrf.mxu0
    %v1195 = vadd.f32 %v1026, %v1194
    %v1196 = vpop.f32.mrf.mxu0
    %v1197 = vadd.f32 %v1028, %v1196
    %1198 = vmatmul.bf16.gmra.mxu0 %v560
    %v1199 = vpop.f32.mrf.mxu0
    %v1200 = vadd.f32 %v1031, %v1199
    %v1201 = vpop.f32.mrf.mxu0
    %v1202 = vadd.f32 %v1033, %v1201
    %1203 = vmatmul.bf16.gmra.mxu0 %v563
    %v1204 = vpop.f32.mrf.mxu0
    %v1205 = vadd.f32 %v1036, %v1204
    %v1206 = vpop.f32.mrf.mxu0
    %v1207 = vadd.f32 %v1038, %v1206
    %1208 = vmatmul.bf16.gmra.mxu0 %v566
    %v1209 = vpop.f32.mrf.mxu0
    %v1210 = vadd.f32 %v1041, %v1209
    %v1211 = vpop.f32.mrf.mxu0
    %v1212 = vadd.f32 %v1043, %v1211
    %1213 = vmatmul.bf16.gmra.mxu0 %v569
    %v1214 = vpop.f32.mrf.mxu0
    %v1215 = vadd.f32 %v1046, %v1214
    %v1216 = vpop.f32.mrf.mxu0
    %v1217 = vadd.f32 %v1048, %v1216
    %1218 = vmatmul.bf16.gmra.mxu0 %v572
    %v1219 = vpop.f32.mrf.mxu0
    %v1220 = vadd.f32 %v1051, %v1219
    %v1221 = vpop.f32.mrf.mxu0
    %v1222 = vadd.f32 %v1053, %v1221
    %1223 = vmatmul.bf16.gmra.mxu0 %v575
    %v1224 = vpop.f32.mrf.mxu0
    %v1225 = vadd.f32 %v1056, %v1224
    %v1226 = vpop.f32.mrf.mxu0
    %v1227 = vadd.f32 %v1058, %v1226
    %1228 = vmatmul.bf16.gmra.mxu0 %v578
    %v1229 = vpop.f32.mrf.mxu0
    %v1230 = vadd.f32 %v1061, %v1229
    %v1231 = vpop.f32.mrf.mxu0
    %v1232 = vadd.f32 %v1063, %v1231
    %1233 = vmatmul.bf16.gmra.mxu0 %v581
    %v1234 = vpop.f32.mrf.mxu0
    %v1235 = vadd.f32 %v1066, %v1234
    %v1236 = vpop.f32.mrf.mxu0
    %v1237 = vadd.f32 %v1068, %v1236
    %1238 = vmatmul.bf16.gmra.mxu0 %v584
    %v1239 = vpop.f32.mrf.mxu0
    %v1240 = vadd.f32 %v1071, %v1239
    %v1241 = vpop.f32.mrf.mxu0
    %v1242 = vadd.f32 %v1073, %v1241
    %1243 = vmatmul.bf16.gmra.mxu0 %v587
    %v1244 = vpop.f32.mrf.mxu0
    %v1245 = vadd.f32 %v1076, %v1244
    %v1246 = vpop.f32.mrf.mxu0
    %v1247 = vadd.f32 %v1078, %v1246
    %1248 = vmatmul.bf16.gmra.mxu0 %v590
    %v1249 = vpop.f32.mrf.mxu0
    %v1250 = vadd.f32 %v1081, %v1249
    %v1251 = vpop.f32.mrf.mxu0
    %v1252 = vadd.f32 %v1083, %v1251
    %1253 = vmatmul.bf16.gmra.mxu0 %v593
    %v1254 = vpop.f32.mrf.mxu0
    %v1255 = vadd.f32 %v1086, %v1254
    %v1256 = vpop.f32.mrf.mxu0
    %v1257 = vadd.f32 %v1088, %v1256
    %1258 = vmatmul.bf16.gmra.mxu0 %v596
    %v1259 = vpop.f32.mrf.mxu0
    %v1260 = vadd.f32 %v1091, %v1259
    %v1261 = vpop.f32.mrf.mxu0
    %v1262 = vadd.f32 %v1093, %v1261
    %1263 = vmatmul.bf16.gmra.mxu0 %v599
    %v1264 = vpop.f32.mrf.mxu0
    %v1265 = vadd.f32 %v1096, %v1264
    %v1266 = vpop.f32.mrf.mxu0
    %v1267 = vadd.f32 %v1098, %v1266
    %1268 = vmatmul.bf16.gmra.mxu0 %v602
    %v1269 = vpop.f32.mrf.mxu0
    %v1270 = vadd.f32 %v1101, %v1269
    %v1271 = vpop.f32.mrf.mxu0
    %v1272 = vadd.f32 %v1103, %v1271
    %1273 = vmatmul.bf16.gmra.mxu0 %v605
    %v1274 = vpop.f32.mrf.mxu0
    %v1275 = vadd.f32 %v1106, %v1274
    %v1276 = vpop.f32.mrf.mxu0
    %v1277 = vadd.f32 %v1108, %v1276
    %1278 = vmatmul.bf16.gmra.mxu0 %v608
    %v1279 = vpop.f32.mrf.mxu0
    %v1280 = vadd.f32 %v1111, %v1279
    %v1281 = vpop.f32.mrf.mxu0
    %v1282 = vadd.f32 %v1113, %v1281
    %1283 = vmatmul.bf16.gmra.mxu0 %v611
    %v1284 = vpop.f32.mrf.mxu0
    %v1285 = vadd.f32 %v1116, %v1284
    %v1286 = vpop.f32.mrf.mxu0
    %v1287 = vadd.f32 %v1118, %v1286
    %1288 = vdwg.mxu0
    %v1289 = vld [vmem:[%s2] sm:$0x3]
    %v1291 = vperm.slane %v1289, 0
    %v1292 = vperm.slane %v1289, 1
    %v1295 = vadd.f32 %v792, %v1291
    %v1296 = vadd.f32 %v1130, %v1292
    %v1297 = vadd.f32 %v794, %v1291
    %v1298 = vadd.f32 %v1132, %v1292
    %v1299 = vadd.f32 %v797, %v1291
    %v1300 = vadd.f32 %v1135, %v1292
    %v1301 = vadd.f32 %v799, %v1291
    %v1302 = vadd.f32 %v1137, %v1292
    %v1303 = vadd.f32 %v802, %v1291
    %v1304 = vadd.f32 %v1140, %v1292
    %v1305 = vadd.f32 %v804, %v1291
    %v1306 = vadd.f32 %v1142, %v1292
    %v1307 = vadd.f32 %v807, %v1291
    %v1308 = vadd.f32 %v1145, %v1292
    %v1309 = vadd.f32 %v809, %v1291
    %v1310 = vadd.f32 %v1147, %v1292
    %v1311 = vadd.f32 %v812, %v1291
    %v1312 = vadd.f32 %v1150, %v1292
    %v1313 = vadd.f32 %v814, %v1291
    %v1314 = vadd.f32 %v1152, %v1292
    %v1315 = vadd.f32 %v817, %v1291
    %v1316 = vadd.f32 %v1155, %v1292
    %v1317 = vadd.f32 %v819, %v1291
    %v1318 = vadd.f32 %v1157, %v1292
    %v1319 = vadd.f32 %v822, %v1291
    %v1320 = vadd.f32 %v1160, %v1292
    %v1321 = vadd.f32 %v824, %v1291
    %v1322 = vadd.f32 %v1162, %v1292
    %v1323 = vadd.f32 %v827, %v1291
    %v1324 = vadd.f32 %v1165, %v1292
    %v1325 = vadd.f32 %v829, %v1291
    %v1326 = vadd.f32 %v1167, %v1292
    %v1327 = vadd.f32 %v832, %v1291
    %v1328 = vadd.f32 %v1170, %v1292
    %v1329 = vadd.f32 %v834, %v1291
    %v1330 = vadd.f32 %v1172, %v1292
    %v1331 = vadd.f32 %v837, %v1291
    %v1332 = vadd.f32 %v1175, %v1292
    %v1333 = vadd.f32 %v839, %v1291
    %v1334 = vadd.f32 %v1177, %v1292
    %v1335 = vadd.f32 %v842, %v1291
    %v1336 = vadd.f32 %v1180, %v1292
    %v1337 = vadd.f32 %v844, %v1291
    %v1338 = vadd.f32 %v1182, %v1292
    %v1339 = vadd.f32 %v847, %v1291
    %v1340 = vadd.f32 %v1185, %v1292
    %v1341 = vadd.f32 %v849, %v1291
    %v1342 = vadd.f32 %v1187, %v1292
    %v1343 = vadd.f32 %v852, %v1291
    %v1344 = vadd.f32 %v1190, %v1292
    %v1345 = vadd.f32 %v854, %v1291
    %v1346 = vadd.f32 %v1192, %v1292
    %v1347 = vadd.f32 %v857, %v1291
    %v1348 = vadd.f32 %v1195, %v1292
    %v1349 = vadd.f32 %v859, %v1291
    %v1350 = vadd.f32 %v1197, %v1292
    %v1351 = vadd.f32 %v862, %v1291
    %v1352 = vadd.f32 %v1200, %v1292
    %v1353 = vadd.f32 %v864, %v1291
    %v1354 = vadd.f32 %v1202, %v1292
    %v1355 = vadd.f32 %v867, %v1291
    %v1356 = vadd.f32 %v1205, %v1292
    %v1357 = vadd.f32 %v869, %v1291
    %v1358 = vadd.f32 %v1207, %v1292
    %v1359 = vadd.f32 %v872, %v1291
    %v1360 = vadd.f32 %v1210, %v1292
    %v1361 = vadd.f32 %v874, %v1291
    %v1362 = vadd.f32 %v1212, %v1292
    %v1363 = vadd.f32 %v877, %v1291
    %v1364 = vadd.f32 %v1215, %v1292
    %v1365 = vadd.f32 %v879, %v1291
    %v1366 = vadd.f32 %v1217, %v1292
    %v1367 = vadd.f32 %v882, %v1291
    %v1368 = vadd.f32 %v1220, %v1292
    %v1369 = vadd.f32 %v884, %v1291
    %v1370 = vadd.f32 %v1222, %v1292
    %v1371 = vadd.f32 %v887, %v1291
    %v1372 = vadd.f32 %v1225, %v1292
    %v1373 = vadd.f32 %v889, %v1291
    %v1374 = vadd.f32 %v1227, %v1292
    %v1375 = vadd.f32 %v892, %v1291
    %v1376 = vadd.f32 %v1230, %v1292
    %v1377 = vadd.f32 %v894, %v1291
    %v1378 = vadd.f32 %v1232, %v1292
    %v1379 = vadd.f32 %v897, %v1291
    %v1380 = vadd.f32 %v1235, %v1292
    %v1381 = vadd.f32 %v899, %v1291
    %v1382 = vadd.f32 %v1237, %v1292
    %v1383 = vadd.f32 %v902, %v1291
    %v1384 = vadd.f32 %v1240, %v1292
    %v1385 = vadd.f32 %v904, %v1291
    %v1386 = vadd.f32 %v1242, %v1292
    %v1387 = vadd.f32 %v907, %v1291
    %v1388 = vadd.f32 %v1245, %v1292
    %v1389 = vadd.f32 %v909, %v1291
    %v1390 = vadd.f32 %v1247, %v1292
    %v1391 = vadd.f32 %v912, %v1291
    %v1392 = vadd.f32 %v1250, %v1292
    %v1393 = vadd.f32 %v914, %v1291
    %v1394 = vadd.f32 %v1252, %v1292
    %v1395 = vadd.f32 %v917, %v1291
    %v1396 = vadd.f32 %v1255, %v1292
    %v1397 = vadd.f32 %v919, %v1291
    %v1398 = vadd.f32 %v1257, %v1292
    %v1399 = vadd.f32 %v922, %v1291
    %v1400 = vadd.f32 %v1260, %v1292
    %v1401 = vadd.f32 %v924, %v1291
    %v1402 = vadd.f32 %v1262, %v1292
    %v1403 = vadd.f32 %v927, %v1291
    %v1404 = vadd.f32 %v1265, %v1292
    %v1405 = vadd.f32 %v929, %v1291
    %v1406 = vadd.f32 %v1267, %v1292
    %v1407 = vadd.f32 %v932, %v1291
    %v1408 = vadd.f32 %v1270, %v1292
    %v1409 = vadd.f32 %v934, %v1291
    %v1410 = vadd.f32 %v1272, %v1292
    %v1411 = vadd.f32 %v937, %v1291
    %v1412 = vadd.f32 %v1275, %v1292
    %v1413 = vadd.f32 %v939, %v1291
    %v1414 = vadd.f32 %v1277, %v1292
    %v1415 = vadd.f32 %v942, %v1291
    %v1416 = vadd.f32 %v1280, %v1292
    %v1417 = vadd.f32 %v944, %v1291
    %v1418 = vadd.f32 %v1282, %v1292
    %v1419 = vadd.f32 %v947, %v1291
    %v1420 = vadd.f32 %v1285, %v1292
    %v1421 = vadd.f32 %v949, %v1291
    %v1422 = vadd.f32 %v1287, %v1292
    %v1423 = vmax.f32 %v1295, 0.0
    %v1424 = vmax.f32 %v1296, 0.0
    %v1425 = vmax.f32 %v1297, 0.0
    %v1426 = vmax.f32 %v1298, 0.0
    %v1427 = vmax.f32 %v1299, 0.0
    %v1428 = vmax.f32 %v1300, 0.0
    %v1429 = vmax.f32 %v1301, 0.0
    %v1430 = vmax.f32 %v1302, 0.0
    %v1431 = vmax.f32 %v1303, 0.0
    %v1432 = vmax.f32 %v1304, 0.0
    %v1433 = vmax.f32 %v1305, 0.0
    %v1434 = vmax.f32 %v1306, 0.0
    %v1435 = vmax.f32 %v1307, 0.0
    %v1436 = vmax.f32 %v1308, 0.0
    %v1437 = vmax.f32 %v1309, 0.0
    %v1438 = vmax.f32 %v1310, 0.0
    %v1439 = vmax.f32 %v1311, 0.0
    %v1440 = vmax.f32 %v1312, 0.0
    %v1441 = vmax.f32 %v1313, 0.0
    %v1442 = vmax.f32 %v1314, 0.0
    %v1443 = vmax.f32 %v1315, 0.0
    %v1444 = vmax.f32 %v1316, 0.0
    %v1445 = vmax.f32 %v1317, 0.0
    %v1446 = vmax.f32 %v1318, 0.0
    %v1447 = vmax.f32 %v1319, 0.0
    %v1448 = vmax.f32 %v1320, 0.0
    %v1449 = vmax.f32 %v1321, 0.0
    %v1450 = vmax.f32 %v1322, 0.0
    %v1451 = vmax.f32 %v1323, 0.0
    %v1452 = vmax.f32 %v1324, 0.0
    %v1453 = vmax.f32 %v1325, 0.0
    %v1454 = vmax.f32 %v1326, 0.0
    %v1455 = vmax.f32 %v1327, 0.0
    %v1456 = vmax.f32 %v1328, 0.0
    %v1457 = vmax.f32 %v1329, 0.0
    %v1458 = vmax.f32 %v1330, 0.0
    %v1459 = vmax.f32 %v1331, 0.0
    %v1460 = vmax.f32 %v1332, 0.0
    %v1461 = vmax.f32 %v1333, 0.0
    %v1462 = vmax.f32 %v1334, 0.0
    %v1463 = vmax.f32 %v1335, 0.0
    %v1464 = vmax.f32 %v1336, 0.0
    %v1465 = vmax.f32 %v1337, 0.0
    %v1466 = vmax.f32 %v1338, 0.0
    %v1467 = vmax.f32 %v1339, 0.0
    %v1468 = vmax.f32 %v1340, 0.0
    %v1469 = vmax.f32 %v1341, 0.0
    %v1470 = vmax.f32 %v1342, 0.0
    %v1471 = vmax.f32 %v1343, 0.0
    %v1472 = vmax.f32 %v1344, 0.0
    %v1473 = vmax.f32 %v1345, 0.0
    %v1474 = vmax.f32 %v1346, 0.0
    %v1475 = vmax.f32 %v1347, 0.0
    %v1476 = vmax.f32 %v1348, 0.0
    %v1477 = vmax.f32 %v1349, 0.0
    %v1478 = vmax.f32 %v1350, 0.0
    %v1479 = vmax.f32 %v1351, 0.0
    %v1480 = vmax.f32 %v1352, 0.0
    %v1481 = vmax.f32 %v1353, 0.0
    %v1482 = vmax.f32 %v1354, 0.0
    %v1483 = vmax.f32 %v1355, 0.0
    %v1484 = vmax.f32 %v1356, 0.0
    %v1485 = vmax.f32 %v1357, 0.0
    %v1486 = vmax.f32 %v1358, 0.0
    %v1487 = vmax.f32 %v1359, 0.0
    %v1488 = vmax.f32 %v1360, 0.0
    %v1489 = vmax.f32 %v1361, 0.0
    %v1490 = vmax.f32 %v1362, 0.0
    %v1491 = vmax.f32 %v1363, 0.0
    %v1492 = vmax.f32 %v1364, 0.0
    %v1493 = vmax.f32 %v1365, 0.0
    %v1494 = vmax.f32 %v1366, 0.0
    %v1495 = vmax.f32 %v1367, 0.0
    %v1496 = vmax.f32 %v1368, 0.0
    %v1497 = vmax.f32 %v1369, 0.0
    %v1498 = vmax.f32 %v1370, 0.0
    %v1499 = vmax.f32 %v1371, 0.0
    %v1500 = vmax.f32 %v1372, 0.0
    %v1501 = vmax.f32 %v1373, 0.0
    %v1502 = vmax.f32 %v1374, 0.0
    %v1503 = vmax.f32 %v1375, 0.0
    %v1504 = vmax.f32 %v1376, 0.0
    %v1505 = vmax.f32 %v1377, 0.0
    %v1506 = vmax.f32 %v1378, 0.0
    %v1507 = vmax.f32 %v1379, 0.0
    %v1508 = vmax.f32 %v1380, 0.0
    %v1509 = vmax.f32 %v1381, 0.0
    %v1510 = vmax.f32 %v1382, 0.0
    %v1511 = vmax.f32 %v1383, 0.0
    %v1512 = vmax.f32 %v1384, 0.0
    %v1513 = vmax.f32 %v1385, 0.0
    %v1514 = vmax.f32 %v1386, 0.0
    %v1515 = vmax.f32 %v1387, 0.0
    %v1516 = vmax.f32 %v1388, 0.0
    %v1517 = vmax.f32 %v1389, 0.0
    %v1518 = vmax.f32 %v1390, 0.0
    %v1519 = vmax.f32 %v1391, 0.0
    %v1520 = vmax.f32 %v1392, 0.0
    %v1521 = vmax.f32 %v1393, 0.0
    %v1522 = vmax.f32 %v1394, 0.0
    %v1523 = vmax.f32 %v1395, 0.0
    %v1524 = vmax.f32 %v1396, 0.0
    %v1525 = vmax.f32 %v1397, 0.0
    %v1526 = vmax.f32 %v1398, 0.0
    %v1527 = vmax.f32 %v1399, 0.0
    %v1528 = vmax.f32 %v1400, 0.0
    %v1529 = vmax.f32 %v1401, 0.0
    %v1530 = vmax.f32 %v1402, 0.0
    %v1531 = vmax.f32 %v1403, 0.0
    %v1532 = vmax.f32 %v1404, 0.0
    %v1533 = vmax.f32 %v1405, 0.0
    %v1534 = vmax.f32 %v1406, 0.0
    %v1535 = vmax.f32 %v1407, 0.0
    %v1536 = vmax.f32 %v1408, 0.0
    %v1537 = vmax.f32 %v1409, 0.0
    %v1538 = vmax.f32 %v1410, 0.0
    %v1539 = vmax.f32 %v1411, 0.0
    %v1540 = vmax.f32 %v1412, 0.0
    %v1541 = vmax.f32 %v1413, 0.0
    %v1542 = vmax.f32 %v1414, 0.0
    %v1543 = vmax.f32 %v1415, 0.0
    %v1544 = vmax.f32 %v1416, 0.0
    %v1545 = vmax.f32 %v1417, 0.0
    %v1546 = vmax.f32 %v1418, 0.0
    %v1547 = vmax.f32 %v1419, 0.0
    %v1548 = vmax.f32 %v1420, 0.0
    %v1549 = vmax.f32 %v1421, 0.0
    %v1550 = vmax.f32 %v1422, 0.0
    %v1551 = vld [vmem:[%s3] sm:$0x3]
    %v1553 = vperm.slane %v1551, 0
    %v1554 = vperm.slane %v1551, 1
    %v1557 = vmul.f32 %v1423, %v1553
    %v1558 = vmul.f32 %v1424, %v1554
    %v1559 = vmul.f32 %v1425, %v1553
    %v1560 = vmul.f32 %v1426, %v1554
    %v1561 = vmul.f32 %v1427, %v1553
    %v1562 = vmul.f32 %v1428, %v1554
    %v1563 = vmul.f32 %v1429, %v1553
    %v1564 = vmul.f32 %v1430, %v1554
    %v1565 = vmul.f32 %v1431, %v1553
    %v1566 = vmul.f32 %v1432, %v1554
    %v1567 = vmul.f32 %v1433, %v1553
    %v1568 = vmul.f32 %v1434, %v1554
    %v1569 = vmul.f32 %v1435, %v1553
    %v1570 = vmul.f32 %v1436, %v1554
    %v1571 = vmul.f32 %v1437, %v1553
    %v1572 = vmul.f32 %v1438, %v1554
    %v1573 = vmul.f32 %v1439, %v1553
    %v1574 = vmul.f32 %v1440, %v1554
    %v1575 = vmul.f32 %v1441, %v1553
    %v1576 = vmul.f32 %v1442, %v1554
    %v1577 = vmul.f32 %v1443, %v1553
    %v1578 = vmul.f32 %v1444, %v1554
    %v1579 = vmul.f32 %v1445, %v1553
    %v1580 = vmul.f32 %v1446, %v1554
    %v1581 = vmul.f32 %v1447, %v1553
    %v1582 = vmul.f32 %v1448, %v1554
    %v1583 = vmul.f32 %v1449, %v1553
    %v1584 = vmul.f32 %v1450, %v1554
    %v1585 = vmul.f32 %v1451, %v1553
    %v1586 = vmul.f32 %v1452, %v1554
    %v1587 = vmul.f32 %v1453, %v1553
    %v1588 = vmul.f32 %v1454, %v1554
    %v1589 = vmul.f32 %v1455, %v1553
    %v1590 = vmul.f32 %v1456, %v1554
    %v1591 = vmul.f32 %v1457, %v1553
    %v1592 = vmul.f32 %v1458, %v1554
    %v1593 = vmul.f32 %v1459, %v1553
    %v1594 = vmul.f32 %v1460, %v1554
    %v1595 = vmul.f32 %v1461, %v1553
    %v1596 = vmul.f32 %v1462, %v1554
    %v1597 = vmul.f32 %v1463, %v1553
    %v1598 = vmul.f32 %v1464, %v1554
    %v1599 = vmul.f32 %v1465, %v1553
    %v1600 = vmul.f32 %v1466, %v1554
    %v1601 = vmul.f32 %v1467, %v1553
    %v1602 = vmul.f32 %v1468, %v1554
    %v1603 = vmul.f32 %v1469, %v1553
    %v1604 = vmul.f32 %v1470, %v1554
    %v1605 = vmul.f32 %v1471, %v1553
    %v1606 = vmul.f32 %v1472, %v1554
    %v1607 = vmul.f32 %v1473, %v1553
    %v1608 = vmul.f32 %v1474, %v1554
    %v1609 = vmul.f32 %v1475, %v1553
    %v1610 = vmul.f32 %v1476, %v1554
    %v1611 = vmul.f32 %v1477, %v1553
    %v1612 = vmul.f32 %v1478, %v1554
    %v1613 = vmul.f32 %v1479, %v1553
    %v1614 = vmul.f32 %v1480, %v1554
    %v1615 = vmul.f32 %v1481, %v1553
    %v1616 = vmul.f32 %v1482, %v1554
    %v1617 = vmul.f32 %v1483, %v1553
    %v1618 = vmul.f32 %v1484, %v1554
    %v1619 = vmul.f32 %v1485, %v1553
    %v1620 = vmul.f32 %v1486, %v1554
    %v1621 = vmul.f32 %v1487, %v1553
    %v1622 = vmul.f32 %v1488, %v1554
    %v1623 = vmul.f32 %v1489, %v1553
    %v1624 = vmul.f32 %v1490, %v1554
    %v1625 = vmul.f32 %v1491, %v1553
    %v1626 = vmul.f32 %v1492, %v1554
    %v1627 = vmul.f32 %v1493, %v1553
    %v1628 = vmul.f32 %v1494, %v1554
    %v1629 = vmul.f32 %v1495, %v1553
    %v1630 = vmul.f32 %v1496, %v1554
    %v1631 = vmul.f32 %v1497, %v1553
    %v1632 = vmul.f32 %v1498, %v1554
    %v1633 = vmul.f32 %v1499, %v1553
    %v1634 = vmul.f32 %v1500, %v1554
    %v1635 = vmul.f32 %v1501, %v1553
    %v1636 = vmul.f32 %v1502, %v1554
    %v1637 = vmul.f32 %v1503, %v1553
    %v1638 = vmul.f32 %v1504, %v1554
    %v1639 = vmul.f32 %v1505, %v1553
    %v1640 = vmul.f32 %v1506, %v1554
    %v1641 = vmul.f32 %v1507, %v1553
    %v1642 = vmul.f32 %v1508, %v1554
    %v1643 = vmul.f32 %v1509, %v1553
    %v1644 = vmul.f32 %v1510, %v1554
    %v1645 = vmul.f32 %v1511, %v1553
    %v1646 = vmul.f32 %v1512, %v1554
    %v1647 = vmul.f32 %v1513, %v1553
    %v1648 = vmul.f32 %v1514, %v1554
    %v1649 = vmul.f32 %v1515, %v1553
    %v1650 = vmul.f32 %v1516, %v1554
    %v1651 = vmul.f32 %v1517, %v1553
    %v1652 = vmul.f32 %v1518, %v1554
    %v1653 = vmul.f32 %v1519, %v1553
    %v1654 = vmul.f32 %v1520, %v1554
    %v1655 = vmul.f32 %v1521, %v1553
    %v1656 = vmul.f32 %v1522, %v1554
    %v1657 = vmul.f32 %v1523, %v1553
    %v1658 = vmul.f32 %v1524, %v1554
    %v1659 = vmul.f32 %v1525, %v1553
    %v1660 = vmul.f32 %v1526, %v1554
    %v1661 = vmul.f32 %v1527, %v1553
    %v1662 = vmul.f32 %v1528, %v1554
    %v1663 = vmul.f32 %v1529, %v1553
    %v1664 = vmul.f32 %v1530, %v1554
    %v1665 = vmul.f32 %v1531, %v1553
    %v1666 = vmul.f32 %v1532, %v1554
    %v1667 = vmul.f32 %v1533, %v1553
    %v1668 = vmul.f32 %v1534, %v1554
    %v1669 = vmul.f32 %v1535, %v1553
    %v1670 = vmul.f32 %v1536, %v1554
    %v1671 = vmul.f32 %v1537, %v1553
    %v1672 = vmul.f32 %v1538, %v1554
    %v1673 = vmul.f32 %v1539, %v1553
    %v1674 = vmul.f32 %v1540, %v1554
    %v1675 = vmul.f32 %v1541, %v1553
    %v1676 = vmul.f32 %v1542, %v1554
    %v1677 = vmul.f32 %v1543, %v1553
    %v1678 = vmul.f32 %v1544, %v1554
    %v1679 = vmul.f32 %v1545, %v1553
    %v1680 = vmul.f32 %v1546, %v1554
    %v1681 = vmul.f32 %v1547, %v1553
    %v1682 = vmul.f32 %v1548, %v1554
    %v1683 = vmul.f32 %v1549, %v1553
    %v1684 = vmul.f32 %v1550, %v1554
    %v1685 = vld [vmem:[%s4] sm:$0xff]
    %v1686 = vld [vmem:[%s4 + $0x8] sm:$0xff]
    %v1687 = vld [vmem:[%s4 + $0x10] sm:$0xff]
    %v1688 = vld [vmem:[%s4 + $0x18] sm:$0xff]
    %v1689 = vadd.f32 %v1557, %v1685
    %v1690 = vadd.f32 %v1558, %v1686
    %v1691 = vadd.f32 %v1559, %v1687
    %v1692 = vadd.f32 %v1560, %v1688
    %v1693 = vadd.f32 %v1561, %v1685
    %v1694 = vadd.f32 %v1562, %v1686
    %v1695 = vadd.f32 %v1563, %v1687
    %v1696 = vadd.f32 %v1564, %v1688
    %v1697 = vadd.f32 %v1565, %v1685
    %v1698 = vadd.f32 %v1566, %v1686
    %v1699 = vadd.f32 %v1567, %v1687
    %v1700 = vadd.f32 %v1568, %v1688
    %v1701 = vadd.f32 %v1569, %v1685
    %v1702 = vadd.f32 %v1570, %v1686
    %v1703 = vadd.f32 %v1571, %v1687
    %v1704 = vadd.f32 %v1572, %v1688
    %v1705 = vadd.f32 %v1573, %v1685
    %v1706 = vadd.f32 %v1574, %v1686
    %v1707 = vadd.f32 %v1575, %v1687
    %v1708 = vadd.f32 %v1576, %v1688
    %v1709 = vadd.f32 %v1577, %v1685
    %v1710 = vadd.f32 %v1578, %v1686
    %v1711 = vadd.f32 %v1579, %v1687
    %v1712 = vadd.f32 %v1580, %v1688
    %v1713 = vadd.f32 %v1581, %v1685
    %v1714 = vadd.f32 %v1582, %v1686
    %v1715 = vadd.f32 %v1583, %v1687
    %v1716 = vadd.f32 %v1584, %v1688
    %v1717 = vadd.f32 %v1585, %v1685
    %v1718 = vadd.f32 %v1586, %v1686
    %v1719 = vadd.f32 %v1587, %v1687
    %v1720 = vadd.f32 %v1588, %v1688
    %v1721 = vadd.f32 %v1589, %v1685
    %v1722 = vadd.f32 %v1590, %v1686
    %v1723 = vadd.f32 %v1591, %v1687
    %v1724 = vadd.f32 %v1592, %v1688
    %v1725 = vadd.f32 %v1593, %v1685
    %v1726 = vadd.f32 %v1594, %v1686
    %v1727 = vadd.f32 %v1595, %v1687
    %v1728 = vadd.f32 %v1596, %v1688
    %v1729 = vadd.f32 %v1597, %v1685
    %v1730 = vadd.f32 %v1598, %v1686
    %v1731 = vadd.f32 %v1599, %v1687
    %v1732 = vadd.f32 %v1600, %v1688
    %v1733 = vadd.f32 %v1601, %v1685
    %v1734 = vadd.f32 %v1602, %v1686
    %v1735 = vadd.f32 %v1603, %v1687
    %v1736 = vadd.f32 %v1604, %v1688
    %v1737 = vadd.f32 %v1605, %v1685
    %v1738 = vadd.f32 %v1606, %v1686
    %v1739 = vadd.f32 %v1607, %v1687
    %v1740 = vadd.f32 %v1608, %v1688
    %v1741 = vadd.f32 %v1609, %v1685
    %v1742 = vadd.f32 %v1610, %v1686
    %v1743 = vadd.f32 %v1611, %v1687
    %v1744 = vadd.f32 %v1612, %v1688
    %v1745 = vadd.f32 %v1613, %v1685
    %v1746 = vadd.f32 %v1614, %v1686
    %v1747 = vadd.f32 %v1615, %v1687
    %v1748 = vadd.f32 %v1616, %v1688
    %v1749 = vadd.f32 %v1617, %v1685
    %v1750 = vadd.f32 %v1618, %v1686
    %v1751 = vadd.f32 %v1619, %v1687
    %v1752 = vadd.f32 %v1620, %v1688
    %v1753 = vadd.f32 %v1621, %v1685
    %v1754 = vadd.f32 %v1622, %v1686
    %v1755 = vadd.f32 %v1623, %v1687
    %v1756 = vadd.f32 %v1624, %v1688
    %v1757 = vadd.f32 %v1625, %v1685
    %v1758 = vadd.f32 %v1626, %v1686
    %v1759 = vadd.f32 %v1627, %v1687
    %v1760 = vadd.f32 %v1628, %v1688
    %v1761 = vadd.f32 %v1629, %v1685
    %v1762 = vadd.f32 %v1630, %v1686
    %v1763 = vadd.f32 %v1631, %v1687
    %v1764 = vadd.f32 %v1632, %v1688
    %v1765 = vadd.f32 %v1633, %v1685
    %v1766 = vadd.f32 %v1634, %v1686
    %v1767 = vadd.f32 %v1635, %v1687
    %v1768 = vadd.f32 %v1636, %v1688
    %v1769 = vadd.f32 %v1637, %v1685
    %v1770 = vadd.f32 %v1638, %v1686
    %v1771 = vadd.f32 %v1639, %v1687
    %v1772 = vadd.f32 %v1640, %v1688
    %v1773 = vadd.f32 %v1641, %v1685
    %v1774 = vadd.f32 %v1642, %v1686
    %v1775 = vadd.f32 %v1643, %v1687
    %v1776 = vadd.f32 %v1644, %v1688
    %v1777 = vadd.f32 %v1645, %v1685
    %v1778 = vadd.f32 %v1646, %v1686
    %v1779 = vadd.f32 %v1647, %v1687
    %v1780 = vadd.f32 %v1648, %v1688
    %v1781 = vadd.f32 %v1649, %v1685
    %v1782 = vadd.f32 %v1650, %v1686
    %v1783 = vadd.f32 %v1651, %v1687
    %v1784 = vadd.f32 %v1652, %v1688
    %v1785 = vadd.f32 %v1653, %v1685
    %v1786 = vadd.f32 %v1654, %v1686
    %v1787 = vadd.f32 %v1655, %v1687
    %v1788 = vadd.f32 %v1656, %v1688
    %v1789 = vadd.f32 %v1657, %v1685
    %v1790 = vadd.f32 %v1658, %v1686
    %v1791 = vadd.f32 %v1659, %v1687
    %v1792 = vadd.f32 %v1660, %v1688
    %v1793 = vadd.f32 %v1661, %v1685
    %v1794 = vadd.f32 %v1662, %v1686
    %v1795 = vadd.f32 %v1663, %v1687
    %v1796 = vadd.f32 %v1664, %v1688
    %v1797 = vadd.f32 %v1665, %v1685
    %v1798 = vadd.f32 %v1666, %v1686
    %v1799 = vadd.f32 %v1667, %v1687
    %v1800 = vadd.f32 %v1668, %v1688
    %v1801 = vadd.f32 %v1669, %v1685
    %v1802 = vadd.f32 %v1670, %v1686
    %v1803 = vadd.f32 %v1671, %v1687
    %v1804 = vadd.f32 %v1672, %v1688
    %v1805 = vadd.f32 %v1673, %v1685
    %v1806 = vadd.f32 %v1674, %v1686
    %v1807 = vadd.f32 %v1675, %v1687
    %v1808 = vadd.f32 %v1676, %v1688
    %v1809 = vadd.f32 %v1677, %v1685
    %v1810 = vadd.f32 %v1678, %v1686
    %v1811 = vadd.f32 %v1679, %v1687
    %v1812 = vadd.f32 %v1680, %v1688
    %v1813 = vadd.f32 %v1681, %v1685
    %v1814 = vadd.f32 %v1682, %v1686
    %v1815 = vadd.f32 %v1683, %v1687
    %v1816 = vadd.f32 %v1684, %v1688
    %v1817 = vmax.f32 %v1689, %v1691
    %v1818 = vrot.slane %v1817, 4
    %v1819 = vmax.f32 %v1817, %v1818
    %v1820 = vrot.slane %v1819, 2
    %v1821 = vmax.f32 %v1819, %v1820
    %v1822 = vrot.slane %v1821, 1
    %v1823 = vmax.f32 %v1821, %v1822
    %vm1824 = vcmask 179200
    %v1825 = vsel %vm1824, %v1690, -inf
    %v1826 = vsel %vm1824, %v1692, -inf
    %v1827 = vmax.f32 %v1825, %v1826
    %v1828 = vrot.slane %v1827, 4
    %v1829 = vmax.f32 %v1827, %v1828
    %v1830 = vrot.slane %v1829, 2
    %v1831 = vmax.f32 %v1829, %v1830
    %v1832 = vrot.slane %v1831, 1
    %v1833 = vmax.f32 %v1831, %v1832
    %v1834 = vmax.f32 %v1693, %v1695
    %v1835 = vrot.slane %v1834, 4
    %v1836 = vmax.f32 %v1834, %v1835
    %v1837 = vrot.slane %v1836, 2
    %v1838 = vmax.f32 %v1836, %v1837
    %v1839 = vrot.slane %v1838, 1
    %v1840 = vmax.f32 %v1838, %v1839
    %v1841 = vsel %vm1824, %v1694, -inf
    %v1842 = vsel %vm1824, %v1696, -inf
    %v1843 = vmax.f32 %v1841, %v1842
    %v1844 = vrot.slane %v1843, 4
    %v1845 = vmax.f32 %v1843, %v1844
    %v1846 = vrot.slane %v1845, 2
    %v1847 = vmax.f32 %v1845, %v1846
    %v1848 = vrot.slane %v1847, 1
    %v1849 = vmax.f32 %v1847, %v1848
    %v1850 = vmax.f32 %v1697, %v1699
    %v1851 = vrot.slane %v1850, 4
    %v1852 = vmax.f32 %v1850, %v1851
    %v1853 = vrot.slane %v1852, 2
    %v1854 = vmax.f32 %v1852, %v1853
    %v1855 = vrot.slane %v1854, 1
    %v1856 = vmax.f32 %v1854, %v1855
    %v1857 = vsel %vm1824, %v1698, -inf
    %v1858 = vsel %vm1824, %v1700, -inf
    %v1859 = vmax.f32 %v1857, %v1858
    %v1860 = vrot.slane %v1859, 4
    %v1861 = vmax.f32 %v1859, %v1860
    %v1862 = vrot.slane %v1861, 2
    %v1863 = vmax.f32 %v1861, %v1862
    %v1864 = vrot.slane %v1863, 1
    %v1865 = vmax.f32 %v1863, %v1864
    %v1866 = vmax.f32 %v1701, %v1703
    %v1867 = vrot.slane %v1866, 4
    %v1868 = vmax.f32 %v1866, %v1867
    %v1869 = vrot.slane %v1868, 2
    %v1870 = vmax.f32 %v1868, %v1869
    %v1871 = vrot.slane %v1870, 1
    %v1872 = vmax.f32 %v1870, %v1871
    %v1873 = vsel %vm1824, %v1702, -inf
    %v1874 = vsel %vm1824, %v1704, -inf
    %v1875 = vmax.f32 %v1873, %v1874
    %v1876 = vrot.slane %v1875, 4
    %v1877 = vmax.f32 %v1875, %v1876
    %v1878 = vrot.slane %v1877, 2
    %v1879 = vmax.f32 %v1877, %v1878
    %v1880 = vrot.slane %v1879, 1
    %v1881 = vmax.f32 %v1879, %v1880
    %v1882 = vmax.f32 %v1705, %v1707
    %v1883 = vrot.slane %v1882, 4
    %v1884 = vmax.f32 %v1882, %v1883
    %v1885 = vrot.slane %v1884, 2
    %v1886 = vmax.f32 %v1884, %v1885
    %v1887 = vrot.slane %v1886, 1
    %v1888 = vmax.f32 %v1886, %v1887
    %v1889 = vsel %vm1824, %v1706, -inf
    %v1890 = vsel %vm1824, %v1708, -inf
    %v1891 = vmax.f32 %v1889, %v1890
    %v1892 = vrot.slane %v1891, 4
    %v1893 = vmax.f32 %v1891, %v1892
    %v1894 = vrot.slane %v1893, 2
    %v1895 = vmax.f32 %v1893, %v1894
    %v1896 = vrot.slane %v1895, 1
    %v1897 = vmax.f32 %v1895, %v1896
    %v1898 = vmax.f32 %v1709, %v1711
    %v1899 = vrot.slane %v1898, 4
    %v1900 = vmax.f32 %v1898, %v1899
    %v1901 = vrot.slane %v1900, 2
    %v1902 = vmax.f32 %v1900, %v1901
    %v1903 = vrot.slane %v1902, 1
    %v1904 = vmax.f32 %v1902, %v1903
    %v1905 = vsel %vm1824, %v1710, -inf
    %v1906 = vsel %vm1824, %v1712, -inf
    %v1907 = vmax.f32 %v1905, %v1906
    %v1908 = vrot.slane %v1907, 4
    %v1909 = vmax.f32 %v1907, %v1908
    %v1910 = vrot.slane %v1909, 2
    %v1911 = vmax.f32 %v1909, %v1910
    %v1912 = vrot.slane %v1911, 1
    %v1913 = vmax.f32 %v1911, %v1912
    %v1914 = vmax.f32 %v1713, %v1715
    %v1915 = vrot.slane %v1914, 4
    %v1916 = vmax.f32 %v1914, %v1915
    %v1917 = vrot.slane %v1916, 2
    %v1918 = vmax.f32 %v1916, %v1917
    %v1919 = vrot.slane %v1918, 1
    %v1920 = vmax.f32 %v1918, %v1919
    %v1921 = vsel %vm1824, %v1714, -inf
    %v1922 = vsel %vm1824, %v1716, -inf
    %v1923 = vmax.f32 %v1921, %v1922
    %v1924 = vrot.slane %v1923, 4
    %v1925 = vmax.f32 %v1923, %v1924
    %v1926 = vrot.slane %v1925, 2
    %v1927 = vmax.f32 %v1925, %v1926
    %v1928 = vrot.slane %v1927, 1
    %v1929 = vmax.f32 %v1927, %v1928
    %v1930 = vmax.f32 %v1717, %v1719
    %v1931 = vrot.slane %v1930, 4
    %v1932 = vmax.f32 %v1930, %v1931
    %v1933 = vrot.slane %v1932, 2
    %v1934 = vmax.f32 %v1932, %v1933
    %v1935 = vrot.slane %v1934, 1
    %v1936 = vmax.f32 %v1934, %v1935
    %v1937 = vsel %vm1824, %v1718, -inf
    %v1938 = vsel %vm1824, %v1720, -inf
    %v1939 = vmax.f32 %v1937, %v1938
    %v1940 = vrot.slane %v1939, 4
    %v1941 = vmax.f32 %v1939, %v1940
    %v1942 = vrot.slane %v1941, 2
    %v1943 = vmax.f32 %v1941, %v1942
    %v1944 = vrot.slane %v1943, 1
    %v1945 = vmax.f32 %v1943, %v1944
    %v1946 = vmax.f32 %v1721, %v1723
    %v1947 = vrot.slane %v1946, 4
    %v1948 = vmax.f32 %v1946, %v1947
    %v1949 = vrot.slane %v1948, 2
    %v1950 = vmax.f32 %v1948, %v1949
    %v1951 = vrot.slane %v1950, 1
    %v1952 = vmax.f32 %v1950, %v1951
    %v1953 = vsel %vm1824, %v1722, -inf
    %v1954 = vsel %vm1824, %v1724, -inf
    %v1955 = vmax.f32 %v1953, %v1954
    %v1956 = vrot.slane %v1955, 4
    %v1957 = vmax.f32 %v1955, %v1956
    %v1958 = vrot.slane %v1957, 2
    %v1959 = vmax.f32 %v1957, %v1958
    %v1960 = vrot.slane %v1959, 1
    %v1961 = vmax.f32 %v1959, %v1960
    %v1962 = vmax.f32 %v1725, %v1727
    %v1963 = vrot.slane %v1962, 4
    %v1964 = vmax.f32 %v1962, %v1963
    %v1965 = vrot.slane %v1964, 2
    %v1966 = vmax.f32 %v1964, %v1965
    %v1967 = vrot.slane %v1966, 1
    %v1968 = vmax.f32 %v1966, %v1967
    %v1969 = vsel %vm1824, %v1726, -inf
    %v1970 = vsel %vm1824, %v1728, -inf
    %v1971 = vmax.f32 %v1969, %v1970
    %v1972 = vrot.slane %v1971, 4
    %v1973 = vmax.f32 %v1971, %v1972
    %v1974 = vrot.slane %v1973, 2
    %v1975 = vmax.f32 %v1973, %v1974
    %v1976 = vrot.slane %v1975, 1
    %v1977 = vmax.f32 %v1975, %v1976
    %v1978 = vmax.f32 %v1729, %v1731
    %v1979 = vrot.slane %v1978, 4
    %v1980 = vmax.f32 %v1978, %v1979
    %v1981 = vrot.slane %v1980, 2
    %v1982 = vmax.f32 %v1980, %v1981
    %v1983 = vrot.slane %v1982, 1
    %v1984 = vmax.f32 %v1982, %v1983
    %v1985 = vsel %vm1824, %v1730, -inf
    %v1986 = vsel %vm1824, %v1732, -inf
    %v1987 = vmax.f32 %v1985, %v1986
    %v1988 = vrot.slane %v1987, 4
    %v1989 = vmax.f32 %v1987, %v1988
    %v1990 = vrot.slane %v1989, 2
    %v1991 = vmax.f32 %v1989, %v1990
    %v1992 = vrot.slane %v1991, 1
    %v1993 = vmax.f32 %v1991, %v1992
    %v1994 = vmax.f32 %v1733, %v1735
    %v1995 = vrot.slane %v1994, 4
    %v1996 = vmax.f32 %v1994, %v1995
    %v1997 = vrot.slane %v1996, 2
    %v1998 = vmax.f32 %v1996, %v1997
    %v1999 = vrot.slane %v1998, 1
    %v2000 = vmax.f32 %v1998, %v1999
    %v2001 = vsel %vm1824, %v1734, -inf
    %v2002 = vsel %vm1824, %v1736, -inf
    %v2003 = vmax.f32 %v2001, %v2002
    %v2004 = vrot.slane %v2003, 4
    %v2005 = vmax.f32 %v2003, %v2004
    %v2006 = vrot.slane %v2005, 2
    %v2007 = vmax.f32 %v2005, %v2006
    %v2008 = vrot.slane %v2007, 1
    %v2009 = vmax.f32 %v2007, %v2008
    %v2010 = vmax.f32 %v1737, %v1739
    %v2011 = vrot.slane %v2010, 4
    %v2012 = vmax.f32 %v2010, %v2011
    %v2013 = vrot.slane %v2012, 2
    %v2014 = vmax.f32 %v2012, %v2013
    %v2015 = vrot.slane %v2014, 1
    %v2016 = vmax.f32 %v2014, %v2015
    %v2017 = vsel %vm1824, %v1738, -inf
    %v2018 = vsel %vm1824, %v1740, -inf
    %v2019 = vmax.f32 %v2017, %v2018
    %v2020 = vrot.slane %v2019, 4
    %v2021 = vmax.f32 %v2019, %v2020
    %v2022 = vrot.slane %v2021, 2
    %v2023 = vmax.f32 %v2021, %v2022
    %v2024 = vrot.slane %v2023, 1
    %v2025 = vmax.f32 %v2023, %v2024
    %v2026 = vmax.f32 %v1741, %v1743
    %v2027 = vrot.slane %v2026, 4
    %v2028 = vmax.f32 %v2026, %v2027
    %v2029 = vrot.slane %v2028, 2
    %v2030 = vmax.f32 %v2028, %v2029
    %v2031 = vrot.slane %v2030, 1
    %v2032 = vmax.f32 %v2030, %v2031
    %v2033 = vsel %vm1824, %v1742, -inf
    %v2034 = vsel %vm1824, %v1744, -inf
    %v2035 = vmax.f32 %v2033, %v2034
    %v2036 = vrot.slane %v2035, 4
    %v2037 = vmax.f32 %v2035, %v2036
    %v2038 = vrot.slane %v2037, 2
    %v2039 = vmax.f32 %v2037, %v2038
    %v2040 = vrot.slane %v2039, 1
    %v2041 = vmax.f32 %v2039, %v2040
    %v2042 = vmax.f32 %v1745, %v1747
    %v2043 = vrot.slane %v2042, 4
    %v2044 = vmax.f32 %v2042, %v2043
    %v2045 = vrot.slane %v2044, 2
    %v2046 = vmax.f32 %v2044, %v2045
    %v2047 = vrot.slane %v2046, 1
    %v2048 = vmax.f32 %v2046, %v2047
    %v2049 = vsel %vm1824, %v1746, -inf
    %v2050 = vsel %vm1824, %v1748, -inf
    %v2051 = vmax.f32 %v2049, %v2050
    %v2052 = vrot.slane %v2051, 4
    %v2053 = vmax.f32 %v2051, %v2052
    %v2054 = vrot.slane %v2053, 2
    %v2055 = vmax.f32 %v2053, %v2054
    %v2056 = vrot.slane %v2055, 1
    %v2057 = vmax.f32 %v2055, %v2056
    %v2058 = vmax.f32 %v1749, %v1751
    %v2059 = vrot.slane %v2058, 4
    %v2060 = vmax.f32 %v2058, %v2059
    %v2061 = vrot.slane %v2060, 2
    %v2062 = vmax.f32 %v2060, %v2061
    %v2063 = vrot.slane %v2062, 1
    %v2064 = vmax.f32 %v2062, %v2063
    %v2065 = vsel %vm1824, %v1750, -inf
    %v2066 = vsel %vm1824, %v1752, -inf
    %v2067 = vmax.f32 %v2065, %v2066
    %v2068 = vrot.slane %v2067, 4
    %v2069 = vmax.f32 %v2067, %v2068
    %v2070 = vrot.slane %v2069, 2
    %v2071 = vmax.f32 %v2069, %v2070
    %v2072 = vrot.slane %v2071, 1
    %v2073 = vmax.f32 %v2071, %v2072
    %v2074 = vmax.f32 %v1753, %v1755
    %v2075 = vrot.slane %v2074, 4
    %v2076 = vmax.f32 %v2074, %v2075
    %v2077 = vrot.slane %v2076, 2
    %v2078 = vmax.f32 %v2076, %v2077
    %v2079 = vrot.slane %v2078, 1
    %v2080 = vmax.f32 %v2078, %v2079
    %v2081 = vsel %vm1824, %v1754, -inf
    %v2082 = vsel %vm1824, %v1756, -inf
    %v2083 = vmax.f32 %v2081, %v2082
    %v2084 = vrot.slane %v2083, 4
    %v2085 = vmax.f32 %v2083, %v2084
    %v2086 = vrot.slane %v2085, 2
    %v2087 = vmax.f32 %v2085, %v2086
    %v2088 = vrot.slane %v2087, 1
    %v2089 = vmax.f32 %v2087, %v2088
    %v2090 = vmax.f32 %v1757, %v1759
    %v2091 = vrot.slane %v2090, 4
    %v2092 = vmax.f32 %v2090, %v2091
    %v2093 = vrot.slane %v2092, 2
    %v2094 = vmax.f32 %v2092, %v2093
    %v2095 = vrot.slane %v2094, 1
    %v2096 = vmax.f32 %v2094, %v2095
    %v2097 = vsel %vm1824, %v1758, -inf
    %v2098 = vsel %vm1824, %v1760, -inf
    %v2099 = vmax.f32 %v2097, %v2098
    %v2100 = vrot.slane %v2099, 4
    %v2101 = vmax.f32 %v2099, %v2100
    %v2102 = vrot.slane %v2101, 2
    %v2103 = vmax.f32 %v2101, %v2102
    %v2104 = vrot.slane %v2103, 1
    %v2105 = vmax.f32 %v2103, %v2104
    %v2106 = vmax.f32 %v1761, %v1763
    %v2107 = vrot.slane %v2106, 4
    %v2108 = vmax.f32 %v2106, %v2107
    %v2109 = vrot.slane %v2108, 2
    %v2110 = vmax.f32 %v2108, %v2109
    %v2111 = vrot.slane %v2110, 1
    %v2112 = vmax.f32 %v2110, %v2111
    %v2113 = vsel %vm1824, %v1762, -inf
    %v2114 = vsel %vm1824, %v1764, -inf
    %v2115 = vmax.f32 %v2113, %v2114
    %v2116 = vrot.slane %v2115, 4
    %v2117 = vmax.f32 %v2115, %v2116
    %v2118 = vrot.slane %v2117, 2
    %v2119 = vmax.f32 %v2117, %v2118
    %v2120 = vrot.slane %v2119, 1
    %v2121 = vmax.f32 %v2119, %v2120
    %v2122 = vmax.f32 %v1765, %v1767
    %v2123 = vrot.slane %v2122, 4
    %v2124 = vmax.f32 %v2122, %v2123
    %v2125 = vrot.slane %v2124, 2
    %v2126 = vmax.f32 %v2124, %v2125
    %v2127 = vrot.slane %v2126, 1
    %v2128 = vmax.f32 %v2126, %v2127
    %v2129 = vsel %vm1824, %v1766, -inf
    %v2130 = vsel %vm1824, %v1768, -inf
    %v2131 = vmax.f32 %v2129, %v2130
    %v2132 = vrot.slane %v2131, 4
    %v2133 = vmax.f32 %v2131, %v2132
    %v2134 = vrot.slane %v2133, 2
    %v2135 = vmax.f32 %v2133, %v2134
    %v2136 = vrot.slane %v2135, 1
    %v2137 = vmax.f32 %v2135, %v2136
    %v2138 = vmax.f32 %v1769, %v1771
    %v2139 = vrot.slane %v2138, 4
    %v2140 = vmax.f32 %v2138, %v2139
    %v2141 = vrot.slane %v2140, 2
    %v2142 = vmax.f32 %v2140, %v2141
    %v2143 = vrot.slane %v2142, 1
    %v2144 = vmax.f32 %v2142, %v2143
    %v2145 = vsel %vm1824, %v1770, -inf
    %v2146 = vsel %vm1824, %v1772, -inf
    %v2147 = vmax.f32 %v2145, %v2146
    %v2148 = vrot.slane %v2147, 4
    %v2149 = vmax.f32 %v2147, %v2148
    %v2150 = vrot.slane %v2149, 2
    %v2151 = vmax.f32 %v2149, %v2150
    %v2152 = vrot.slane %v2151, 1
    %v2153 = vmax.f32 %v2151, %v2152
    %v2154 = vmax.f32 %v1773, %v1775
    %v2155 = vrot.slane %v2154, 4
    %v2156 = vmax.f32 %v2154, %v2155
    %v2157 = vrot.slane %v2156, 2
    %v2158 = vmax.f32 %v2156, %v2157
    %v2159 = vrot.slane %v2158, 1
    %v2160 = vmax.f32 %v2158, %v2159
    %v2161 = vsel %vm1824, %v1774, -inf
    %v2162 = vsel %vm1824, %v1776, -inf
    %v2163 = vmax.f32 %v2161, %v2162
    %v2164 = vrot.slane %v2163, 4
    %v2165 = vmax.f32 %v2163, %v2164
    %v2166 = vrot.slane %v2165, 2
    %v2167 = vmax.f32 %v2165, %v2166
    %v2168 = vrot.slane %v2167, 1
    %v2169 = vmax.f32 %v2167, %v2168
    %v2170 = vmax.f32 %v1777, %v1779
    %v2171 = vrot.slane %v2170, 4
    %v2172 = vmax.f32 %v2170, %v2171
    %v2173 = vrot.slane %v2172, 2
    %v2174 = vmax.f32 %v2172, %v2173
    %v2175 = vrot.slane %v2174, 1
    %v2176 = vmax.f32 %v2174, %v2175
    %v2177 = vsel %vm1824, %v1778, -inf
    %v2178 = vsel %vm1824, %v1780, -inf
    %v2179 = vmax.f32 %v2177, %v2178
    %v2180 = vrot.slane %v2179, 4
    %v2181 = vmax.f32 %v2179, %v2180
    %v2182 = vrot.slane %v2181, 2
    %v2183 = vmax.f32 %v2181, %v2182
    %v2184 = vrot.slane %v2183, 1
    %v2185 = vmax.f32 %v2183, %v2184
    %v2186 = vmax.f32 %v1781, %v1783
    %v2187 = vrot.slane %v2186, 4
    %v2188 = vmax.f32 %v2186, %v2187
    %v2189 = vrot.slane %v2188, 2
    %v2190 = vmax.f32 %v2188, %v2189
    %v2191 = vrot.slane %v2190, 1
    %v2192 = vmax.f32 %v2190, %v2191
    %v2193 = vsel %vm1824, %v1782, -inf
    %v2194 = vsel %vm1824, %v1784, -inf
    %v2195 = vmax.f32 %v2193, %v2194
    %v2196 = vrot.slane %v2195, 4
    %v2197 = vmax.f32 %v2195, %v2196
    %v2198 = vrot.slane %v2197, 2
    %v2199 = vmax.f32 %v2197, %v2198
    %v2200 = vrot.slane %v2199, 1
    %v2201 = vmax.f32 %v2199, %v2200
    %v2202 = vmax.f32 %v1785, %v1787
    %v2203 = vrot.slane %v2202, 4
    %v2204 = vmax.f32 %v2202, %v2203
    %v2205 = vrot.slane %v2204, 2
    %v2206 = vmax.f32 %v2204, %v2205
    %v2207 = vrot.slane %v2206, 1
    %v2208 = vmax.f32 %v2206, %v2207
    %v2209 = vsel %vm1824, %v1786, -inf
    %v2210 = vsel %vm1824, %v1788, -inf
    %v2211 = vmax.f32 %v2209, %v2210
    %v2212 = vrot.slane %v2211, 4
    %v2213 = vmax.f32 %v2211, %v2212
    %v2214 = vrot.slane %v2213, 2
    %v2215 = vmax.f32 %v2213, %v2214
    %v2216 = vrot.slane %v2215, 1
    %v2217 = vmax.f32 %v2215, %v2216
    %v2218 = vmax.f32 %v1789, %v1791
    %v2219 = vrot.slane %v2218, 4
    %v2220 = vmax.f32 %v2218, %v2219
    %v2221 = vrot.slane %v2220, 2
    %v2222 = vmax.f32 %v2220, %v2221
    %v2223 = vrot.slane %v2222, 1
    %v2224 = vmax.f32 %v2222, %v2223
    %v2225 = vsel %vm1824, %v1790, -inf
    %v2226 = vsel %vm1824, %v1792, -inf
    %v2227 = vmax.f32 %v2225, %v2226
    %v2228 = vrot.slane %v2227, 4
    %v2229 = vmax.f32 %v2227, %v2228
    %v2230 = vrot.slane %v2229, 2
    %v2231 = vmax.f32 %v2229, %v2230
    %v2232 = vrot.slane %v2231, 1
    %v2233 = vmax.f32 %v2231, %v2232
    %v2234 = vmax.f32 %v1793, %v1795
    %v2235 = vrot.slane %v2234, 4
    %v2236 = vmax.f32 %v2234, %v2235
    %v2237 = vrot.slane %v2236, 2
    %v2238 = vmax.f32 %v2236, %v2237
    %v2239 = vrot.slane %v2238, 1
    %v2240 = vmax.f32 %v2238, %v2239
    %v2241 = vsel %vm1824, %v1794, -inf
    %v2242 = vsel %vm1824, %v1796, -inf
    %v2243 = vmax.f32 %v2241, %v2242
    %v2244 = vrot.slane %v2243, 4
    %v2245 = vmax.f32 %v2243, %v2244
    %v2246 = vrot.slane %v2245, 2
    %v2247 = vmax.f32 %v2245, %v2246
    %v2248 = vrot.slane %v2247, 1
    %v2249 = vmax.f32 %v2247, %v2248
    %v2250 = vmax.f32 %v1797, %v1799
    %v2251 = vrot.slane %v2250, 4
    %v2252 = vmax.f32 %v2250, %v2251
    %v2253 = vrot.slane %v2252, 2
    %v2254 = vmax.f32 %v2252, %v2253
    %v2255 = vrot.slane %v2254, 1
    %v2256 = vmax.f32 %v2254, %v2255
    %v2257 = vsel %vm1824, %v1798, -inf
    %v2258 = vsel %vm1824, %v1800, -inf
    %v2259 = vmax.f32 %v2257, %v2258
    %v2260 = vrot.slane %v2259, 4
    %v2261 = vmax.f32 %v2259, %v2260
    %v2262 = vrot.slane %v2261, 2
    %v2263 = vmax.f32 %v2261, %v2262
    %v2264 = vrot.slane %v2263, 1
    %v2265 = vmax.f32 %v2263, %v2264
    %v2266 = vmax.f32 %v1801, %v1803
    %v2267 = vrot.slane %v2266, 4
    %v2268 = vmax.f32 %v2266, %v2267
    %v2269 = vrot.slane %v2268, 2
    %v2270 = vmax.f32 %v2268, %v2269
    %v2271 = vrot.slane %v2270, 1
    %v2272 = vmax.f32 %v2270, %v2271
    %v2273 = vsel %vm1824, %v1802, -inf
    %v2274 = vsel %vm1824, %v1804, -inf
    %v2275 = vmax.f32 %v2273, %v2274
    %v2276 = vrot.slane %v2275, 4
    %v2277 = vmax.f32 %v2275, %v2276
    %v2278 = vrot.slane %v2277, 2
    %v2279 = vmax.f32 %v2277, %v2278
    %v2280 = vrot.slane %v2279, 1
    %v2281 = vmax.f32 %v2279, %v2280
    %v2282 = vmax.f32 %v1805, %v1807
    %v2283 = vrot.slane %v2282, 4
    %v2284 = vmax.f32 %v2282, %v2283
    %v2285 = vrot.slane %v2284, 2
    %v2286 = vmax.f32 %v2284, %v2285
    %v2287 = vrot.slane %v2286, 1
    %v2288 = vmax.f32 %v2286, %v2287
    %v2289 = vsel %vm1824, %v1806, -inf
    %v2290 = vsel %vm1824, %v1808, -inf
    %v2291 = vmax.f32 %v2289, %v2290
    %v2292 = vrot.slane %v2291, 4
    %v2293 = vmax.f32 %v2291, %v2292
    %v2294 = vrot.slane %v2293, 2
    %v2295 = vmax.f32 %v2293, %v2294
    %v2296 = vrot.slane %v2295, 1
    %v2297 = vmax.f32 %v2295, %v2296
    %v2298 = vmax.f32 %v1809, %v1811
    %v2299 = vrot.slane %v2298, 4
    %v2300 = vmax.f32 %v2298, %v2299
    %v2301 = vrot.slane %v2300, 2
    %v2302 = vmax.f32 %v2300, %v2301
    %v2303 = vrot.slane %v2302, 1
    %v2304 = vmax.f32 %v2302, %v2303
    %v2305 = vsel %vm1824, %v1810, -inf
    %v2306 = vsel %vm1824, %v1812, -inf
    %v2307 = vmax.f32 %v2305, %v2306
    %v2308 = vrot.slane %v2307, 4
    %v2309 = vmax.f32 %v2307, %v2308
    %v2310 = vrot.slane %v2309, 2
    %v2311 = vmax.f32 %v2309, %v2310
    %v2312 = vrot.slane %v2311, 1
    %v2313 = vmax.f32 %v2311, %v2312
    %v2314 = vmax.f32 %v1813, %v1815
    %v2315 = vrot.slane %v2314, 4
    %v2316 = vmax.f32 %v2314, %v2315
    %v2317 = vrot.slane %v2316, 2
    %v2318 = vmax.f32 %v2316, %v2317
    %v2319 = vrot.slane %v2318, 1
    %v2320 = vmax.f32 %v2318, %v2319
    %v2321 = vsel %vm1824, %v1814, -inf
    %v2322 = vsel %vm1824, %v1816, -inf
    %v2323 = vmax.f32 %v2321, %v2322
    %v2324 = vrot.slane %v2323, 4
    %v2325 = vmax.f32 %v2323, %v2324
    %v2326 = vrot.slane %v2325, 2
    %v2327 = vmax.f32 %v2325, %v2326
    %v2328 = vrot.slane %v2327, 1
    %v2329 = vmax.f32 %v2327, %v2328
    %v2330 = vpack.c.bf16 %v1823, %v1823
    %v2331 = vpack.c.bf16 %v1833, %v1833
    %v2332 = vpack.c.bf16 %v1840, %v1840
    %v2333 = vpack.c.bf16 %v1849, %v1849
    %v2334 = vpack.c.bf16 %v1856, %v1856
    %v2335 = vpack.c.bf16 %v1865, %v1865
    %v2336 = vpack.c.bf16 %v1872, %v1872
    %v2337 = vpack.c.bf16 %v1881, %v1881
    %v2338 = vpack.c.bf16 %v1888, %v1888
    %v2339 = vpack.c.bf16 %v1897, %v1897
    %v2340 = vpack.c.bf16 %v1904, %v1904
    %v2341 = vpack.c.bf16 %v1913, %v1913
    %v2342 = vpack.c.bf16 %v1920, %v1920
    %v2343 = vpack.c.bf16 %v1929, %v1929
    %v2344 = vpack.c.bf16 %v1936, %v1936
    %v2345 = vpack.c.bf16 %v1945, %v1945
    %v2346 = vpack.c.bf16 %v1952, %v1952
    %v2347 = vpack.c.bf16 %v1961, %v1961
    %v2348 = vpack.c.bf16 %v1968, %v1968
    %v2349 = vpack.c.bf16 %v1977, %v1977
    %v2350 = vpack.c.bf16 %v1984, %v1984
    %v2351 = vpack.c.bf16 %v1993, %v1993
    %v2352 = vpack.c.bf16 %v2000, %v2000
    %v2353 = vpack.c.bf16 %v2009, %v2009
    %v2354 = vpack.c.bf16 %v2016, %v2016
    %v2355 = vpack.c.bf16 %v2025, %v2025
    %v2356 = vpack.c.bf16 %v2032, %v2032
    %v2357 = vpack.c.bf16 %v2041, %v2041
    %v2358 = vpack.c.bf16 %v2048, %v2048
    %v2359 = vpack.c.bf16 %v2057, %v2057
    %v2360 = vpack.c.bf16 %v2064, %v2064
    %v2361 = vpack.c.bf16 %v2073, %v2073
    %v2362 = vpack.c.bf16 %v2080, %v2080
    %v2363 = vpack.c.bf16 %v2089, %v2089
    %v2364 = vpack.c.bf16 %v2096, %v2096
    %v2365 = vpack.c.bf16 %v2105, %v2105
    %v2366 = vpack.c.bf16 %v2112, %v2112
    %v2367 = vpack.c.bf16 %v2121, %v2121
    %v2368 = vpack.c.bf16 %v2128, %v2128
    %v2369 = vpack.c.bf16 %v2137, %v2137
    %v2370 = vpack.c.bf16 %v2144, %v2144
    %v2371 = vpack.c.bf16 %v2153, %v2153
    %v2372 = vpack.c.bf16 %v2160, %v2160
    %v2373 = vpack.c.bf16 %v2169, %v2169
    %v2374 = vpack.c.bf16 %v2176, %v2176
    %v2375 = vpack.c.bf16 %v2185, %v2185
    %v2376 = vpack.c.bf16 %v2192, %v2192
    %v2377 = vpack.c.bf16 %v2201, %v2201
    %v2378 = vpack.c.bf16 %v2208, %v2208
    %v2379 = vpack.c.bf16 %v2217, %v2217
    %v2380 = vpack.c.bf16 %v2224, %v2224
    %v2381 = vpack.c.bf16 %v2233, %v2233
    %v2382 = vpack.c.bf16 %v2240, %v2240
    %v2383 = vpack.c.bf16 %v2249, %v2249
    %v2384 = vpack.c.bf16 %v2256, %v2256
    %v2385 = vpack.c.bf16 %v2265, %v2265
    %v2386 = vpack.c.bf16 %v2272, %v2272
    %v2387 = vpack.c.bf16 %v2281, %v2281
    %v2388 = vpack.c.bf16 %v2288, %v2288
    %v2389 = vpack.c.bf16 %v2297, %v2297
    %v2390 = vpack.c.bf16 %v2304, %v2304
    %v2391 = vpack.c.bf16 %v2313, %v2313
    %v2392 = vpack.c.bf16 %v2320, %v2320
    %v2393 = vpack.c.bf16 %v2329, %v2329
    %v2394 = vld [vmem:[%s5] sm:$0xf]
    %v2395 = vld [vmem:[%s5 + $0x4] sm:$0xf]
    %v2396 = vld [vmem:[%s5 + $0x8] sm:$0xf]
    %v2397 = vld [vmem:[%s5 + $0xc] sm:$0xf]
    %v2398 = vld [vmem:[%s5 + $0x10] sm:$0xf]
    %v2399 = vld [vmem:[%s5 + $0x14] sm:$0xf]
    %v2400 = vld [vmem:[%s5 + $0x18] sm:$0xf]
    %v2401 = vld [vmem:[%s5 + $0x1c] sm:$0xf]
    %v2402 = vld [vmem:[%s5 + $0x20] sm:$0xf]
    %v2403 = vld [vmem:[%s5 + $0x24] sm:$0xf]
    %v2404 = vld [vmem:[%s5 + $0x28] sm:$0xf]
    %v2405 = vld [vmem:[%s5 + $0x2c] sm:$0xf]
    %v2406 = vld [vmem:[%s5 + $0x30] sm:$0xf]
    %v2407 = vld [vmem:[%s5 + $0x34] sm:$0xf]
    %v2408 = vld [vmem:[%s5 + $0x38] sm:$0xf]
    %v2409 = vld [vmem:[%s5 + $0x3c] sm:$0xf]
    %v2410 = vld [vmem:[%s5 + $0x40] sm:$0xf]
    %v2411 = vld [vmem:[%s5 + $0x44] sm:$0xf]
    %v2412 = vld [vmem:[%s5 + $0x48] sm:$0x7]
    %v2413 = vld [vmem:[%s6] sm:$0x1]
    %v2415 = vperm.slane %v2413, 0
    %v2481 = vunpack.c.l.b16 %v2330
    %v2482 = vunpack.c.l.b16 %v2331
    %v2483 = vunpack.c.l.b16 %v2332
    %v2484 = vunpack.c.l.b16 %v2333
    %v2485 = vunpack.c.l.b16 %v2334
    %v2486 = vunpack.c.l.b16 %v2335
    %v2487 = vunpack.c.l.b16 %v2336
    %v2488 = vunpack.c.l.b16 %v2337
    %v2489 = vunpack.c.l.b16 %v2338
    %v2490 = vunpack.c.l.b16 %v2339
    %v2491 = vunpack.c.l.b16 %v2340
    %v2492 = vunpack.c.l.b16 %v2341
    %v2493 = vunpack.c.l.b16 %v2342
    %v2494 = vunpack.c.l.b16 %v2343
    %v2495 = vunpack.c.l.b16 %v2344
    %v2496 = vunpack.c.l.b16 %v2345
    %v2497 = vunpack.c.l.b16 %v2346
    %v2498 = vunpack.c.l.b16 %v2347
    %v2499 = vunpack.c.l.b16 %v2348
    %v2500 = vunpack.c.l.b16 %v2349
    %v2501 = vunpack.c.l.b16 %v2350
    %v2502 = vunpack.c.l.b16 %v2351
    %v2503 = vunpack.c.l.b16 %v2352
    %v2504 = vunpack.c.l.b16 %v2353
    %v2505 = vunpack.c.l.b16 %v2354
    %v2506 = vunpack.c.l.b16 %v2355
    %v2507 = vunpack.c.l.b16 %v2356
    %v2508 = vunpack.c.l.b16 %v2357
    %v2509 = vunpack.c.l.b16 %v2358
    %v2510 = vunpack.c.l.b16 %v2359
    %v2511 = vunpack.c.l.b16 %v2360
    %v2512 = vunpack.c.l.b16 %v2361
    %v2513 = vunpack.c.l.b16 %v2362
    %v2514 = vunpack.c.l.b16 %v2363
    %v2515 = vunpack.c.l.b16 %v2364
    %v2516 = vunpack.c.l.b16 %v2365
    %v2517 = vunpack.c.l.b16 %v2366
    %v2518 = vunpack.c.l.b16 %v2367
    %v2519 = vunpack.c.l.b16 %v2368
    %v2520 = vunpack.c.l.b16 %v2369
    %v2521 = vunpack.c.l.b16 %v2370
    %v2522 = vunpack.c.l.b16 %v2371
    %v2523 = vunpack.c.l.b16 %v2372
    %v2524 = vunpack.c.l.b16 %v2373
    %v2525 = vunpack.c.l.b16 %v2374
    %v2526 = vunpack.c.l.b16 %v2375
    %v2527 = vunpack.c.l.b16 %v2376
    %v2528 = vunpack.c.l.b16 %v2377
    %v2529 = vunpack.c.l.b16 %v2378
    %v2530 = vunpack.c.l.b16 %v2379
    %v2531 = vunpack.c.l.b16 %v2380
    %v2532 = vunpack.c.l.b16 %v2381
    %v2533 = vunpack.c.l.b16 %v2382
    %v2534 = vunpack.c.l.b16 %v2383
    %v2535 = vunpack.c.l.b16 %v2384
    %v2536 = vunpack.c.l.b16 %v2385
    %v2537 = vunpack.c.l.b16 %v2386
    %v2538 = vunpack.c.l.b16 %v2387
    %v2539 = vunpack.c.l.b16 %v2388
    %v2540 = vunpack.c.l.b16 %v2389
    %v2541 = vunpack.c.l.b16 %v2390
    %v2542 = vunpack.c.l.b16 %v2391
    %v2543 = vunpack.c.l.b16 %v2392
    %v2544 = vunpack.c.l.b16 %v2393
    %vm2545 = vcmask 1041409
    %v2546 = vsel %vm2545, %v2483, %v2481
    %vm2547 = vcmask 1042434
    %v2548 = vsel %vm2547, %v2485, %v2546
    %vm2549 = vcmask 1043459
    %v2550 = vsel %vm2549, %v2487, %v2548
    %vm2551 = vcmask 1044484
    %v2552 = vsel %vm2551, %v2489, %v2550
    %vm2553 = vcmask 1045509
    %v2554 = vsel %vm2553, %v2491, %v2552
    %vm2555 = vcmask 1046534
    %v2556 = vsel %vm2555, %v2493, %v2554
    %vm2557 = vcmask 1047559
    %v2558 = vsel %vm2557, %v2495, %v2556
    %v2559 = vsel %vm2545, %v2484, %v2482
    %v2560 = vsel %vm2547, %v2486, %v2559
    %v2561 = vsel %vm2549, %v2488, %v2560
    %v2562 = vsel %vm2551, %v2490, %v2561
    %v2563 = vsel %vm2553, %v2492, %v2562
    %v2564 = vsel %vm2555, %v2494, %v2563
    %v2565 = vsel %vm2557, %v2496, %v2564
    %v2566 = vsel %vm2545, %v2499, %v2497
    %v2567 = vsel %vm2547, %v2501, %v2566
    %v2568 = vsel %vm2549, %v2503, %v2567
    %v2569 = vsel %vm2551, %v2505, %v2568
    %v2570 = vsel %vm2553, %v2507, %v2569
    %v2571 = vsel %vm2555, %v2509, %v2570
    %v2572 = vsel %vm2557, %v2511, %v2571
    %v2573 = vsel %vm2545, %v2500, %v2498
    %v2574 = vsel %vm2547, %v2502, %v2573
    %v2575 = vsel %vm2549, %v2504, %v2574
    %v2576 = vsel %vm2551, %v2506, %v2575
    %v2577 = vsel %vm2553, %v2508, %v2576
    %v2578 = vsel %vm2555, %v2510, %v2577
    %v2579 = vsel %vm2557, %v2512, %v2578
    %v2580 = vsel %vm2545, %v2515, %v2513
    %v2581 = vsel %vm2547, %v2517, %v2580
    %v2582 = vsel %vm2549, %v2519, %v2581
    %v2583 = vsel %vm2551, %v2521, %v2582
    %v2584 = vsel %vm2553, %v2523, %v2583
    %v2585 = vsel %vm2555, %v2525, %v2584
    %v2586 = vsel %vm2557, %v2527, %v2585
    %v2587 = vsel %vm2545, %v2516, %v2514
    %v2588 = vsel %vm2547, %v2518, %v2587
    %v2589 = vsel %vm2549, %v2520, %v2588
    %v2590 = vsel %vm2551, %v2522, %v2589
    %v2591 = vsel %vm2553, %v2524, %v2590
    %v2592 = vsel %vm2555, %v2526, %v2591
    %v2593 = vsel %vm2557, %v2528, %v2592
    %v2594 = vsel %vm2545, %v2531, %v2529
    %v2595 = vsel %vm2547, %v2533, %v2594
    %v2596 = vsel %vm2549, %v2535, %v2595
    %v2597 = vsel %vm2551, %v2537, %v2596
    %v2598 = vsel %vm2553, %v2539, %v2597
    %v2599 = vsel %vm2555, %v2541, %v2598
    %v2600 = vsel %vm2557, %v2543, %v2599
    %v2601 = vsel %vm2545, %v2532, %v2530
    %v2602 = vsel %vm2547, %v2534, %v2601
    %v2603 = vsel %vm2549, %v2536, %v2602
    %v2604 = vsel %vm2551, %v2538, %v2603
    %v2605 = vsel %vm2553, %v2540, %v2604
    %v2606 = vsel %vm2555, %v2542, %v2605
    %v2607 = vsel %vm2557, %v2544, %v2606
    %v2608 = vpack.c.b16 %v2572, %v2558
    %v2609 = vpack.c.b16 %v2579, %v2565
    %v2610 = vpack.c.b16 %v2600, %v2586
    %v2611 = vpack.c.b16 %v2607, %v2593
    %v2633 = vunpack.c.l.b16 %v2394
    %v2634 = vunpack.c.l.b16 %v2395
    %v2635 = vunpack.c.l.b16 %v2396
    %v2636 = vunpack.c.l.b16 %v2397
    %v2637 = vunpack.c.l.b16 %v2398
    %v2638 = vunpack.c.l.b16 %v2399
    %v2639 = vunpack.c.l.b16 %v2400
    %v2640 = vunpack.c.l.b16 %v2401
    %v2641 = vunpack.c.l.b16 %v2402
    %v2642 = vunpack.c.l.b16 %v2403
    %v2643 = vunpack.c.l.b16 %v2404
    %v2644 = vunpack.c.l.b16 %v2405
    %v2645 = vunpack.c.l.b16 %v2406
    %v2646 = vunpack.c.l.b16 %v2407
    %v2647 = vunpack.c.l.b16 %v2408
    %v2648 = vunpack.c.l.b16 %v2409
    %v2649 = vunpack.c.l.b16 %v2410
    %v2650 = vunpack.c.l.b16 %v2411
    %v2651 = vunpack.c.l.b16 %v2412
    %v2652 = vpack.c.b16 %v2634, %v2633
    %v2653 = vpack.c.b16 %v2636, %v2635
    %v2654 = vpack.c.b16 %v2638, %v2637
    %v2655 = vpack.c.b16 %v2640, %v2639
    %v2656 = vpack.c.b16 %v2642, %v2641
    %v2657 = vpack.c.b16 %v2644, %v2643
    %v2658 = vpack.c.b16 %v2646, %v2645
    %v2659 = vpack.c.b16 %v2648, %v2647
    %v2660 = vpack.c.b16 %v2650, %v2649
    %v2661 = vpack.c.b16 %v2651, %v2651
    %v2672 = vsel %vm1824, %v2609, 0
    %v2675 = vsel %vm1824, %v2611, 0
    %vm2677 = vcmask 1042432
    %v2679 = vsel %vm2677, %v2661, 0
    %2681 = vmatpush.bf16.msra.mxu0 %v2659
    %2682 = vmatpush.bf16.msra.mxu0 %v2658
    %2683 = vmatpush.bf16.msra.mxu0 %v2657
    %2684 = vmatpush.bf16.msra.mxu0 %v2656
    %2685 = vmatpush.bf16.msra.mxu0 %v2655
    %2686 = vmatpush.bf16.msra.mxu0 %v2654
    %2687 = vmatpush.bf16.msra.mxu0 %v2653
    %2688 = vmatpush.bf16.msra.mxu0 %v2652
    %2689 = vmatmul.bf16.gmra.mxu0 %v2608
    %v2690 = vpop.f32.mrf.mxu0
    %v2691 = vadd.f32 %v2415, %v2690
    %v2692 = vpop.f32.mrf.mxu0
    %v2693 = vadd.f32 %v2415, %v2692
    %2694 = vmatmul.bf16.gmra.mxu0 %v2610
    %v2695 = vpop.f32.mrf.mxu0
    %v2696 = vadd.f32 %v2415, %v2695
    %v2697 = vpop.f32.mrf.mxu0
    %v2698 = vadd.f32 %v2415, %v2697
    %2699 = vdwg.mxu0
    %2700 = vmatpush.bf16.msra.mxu0 0
    %2701 = vmatpush.bf16.msra.mxu0 0
    %2702 = vmatpush.bf16.msra.mxu0 0
    %2703 = vmatpush.bf16.msra.mxu0 0
    %2704 = vmatpush.bf16.msra.mxu0 0
    %2705 = vmatpush.bf16.msra.mxu0 0
    %2706 = vmatpush.bf16.msra.mxu0 %v2679
    %2707 = vmatpush.bf16.msra.mxu0 %v2660
    %2708 = vmatmul.bf16.gmra.mxu0 %v2672
    %v2709 = vpop.f32.mrf.mxu0
    %v2710 = vadd.f32 %v2691, %v2709
    %v2711 = vpop.f32.mrf.mxu0
    %v2712 = vadd.f32 %v2693, %v2711
    %2713 = vmatmul.bf16.gmra.mxu0 %v2675
    %v2714 = vpop.f32.mrf.mxu0
    %v2715 = vadd.f32 %v2696, %v2714
    %v2716 = vpop.f32.mrf.mxu0
    %v2717 = vadd.f32 %v2698, %v2716
    %2718 = vdwg.mxu0
    %2719 = vst [vmem:[#allocation5] sm:$0xff] %v2710
    %2720 = vst [vmem:[#allocation5 + $0x8] sm:$0xff] %v2712
    %2721 = vst [vmem:[#allocation5 + $0x10] sm:$0xff] %v2715
    %2722 = vst [vmem:[#allocation5 + $0x18] sm:$0xff] %v2717
    // Predicated region
    $region34: #{tpu_custom_call.1} parent=1 // pred_check
      _
    $region35: #{tpu_custom_call.1} parent=1 // pred_check_branch
      %2724 = sbr.rel (0) target = $region37
    $region36: #{tpu_custom_call.1} parent=1 // pred_region
      %2726 = vsyncadd [#allocation4], 0
      %s2727 = sshll.u32 [#allocation5], 4
      %s2728 = int_to_ptr.vmem [resolvable:$true] %s2727
      %s2729 = sshll.u32 %s7, 4
      %s2730 = int_to_ptr.hbm [resolvable:$true] %s2729
      %2735 = dma.vmem_to_hbm [thread:$0]  %s2728, 512, %s2730, [#allocation4], 128, 128, 8
    $region37: #{tpu_custom_call.1} parent=1 // pred_fallthru
      _
    // Predicated region
    $region38: #{tpu_custom_call.1} parent=1 // pred_check
      _
    $region39: #{tpu_custom_call.1} parent=1 // pred_check_branch
      %2737 = sbr.rel (0) target = $region41
    $region40: #{tpu_custom_call.1} parent=1 // pred_region
      %2739 = dma.done [#allocation4], 512
    $region41: #{tpu_custom_call.1} parent=1 // pred_fallthru
      _
    %2740 = vsyncpa [#allocation3], 1
    %2741 = vsyncpa [#allocation4], 1

</llo_original>
